<compile_context>
chip_gen: v6e
topology: v6e:2x2x1
jax: 0.10.0
libtpu: 0.0.40
codegen_flags: <defaults>
</compile_context>

<pallas_src>
import jax
import jax.numpy as jnp
from jax.experimental import pallas as pl
from jax.experimental.pallas import tpu as pltpu

IN_FEATURES = 32 * 32   # 1024
HIDDEN = 512
OUT_FEATURES = 6
OUT_PAD = 128           # pad last layer to a lane-dense width; sliced back to 6 in wrapper
TILE_B_MAX = 128        # batch tile (multiple of 8; 128 fills the MXU on all chips)


def _round_up(x, m):
    return ((x + m - 1) // m) * m


def mlp_kernel(x_ref, w1_ref, b1_ref, w2_ref, b2_ref, w3_ref, b3_ref, o_ref):
    # x_ref: (TILE_B, 1024) bf16; w*: (in, out) bf16; b*: (1, out) f32; o_ref: (TILE_B, OUT_PAD) f32
    x = x_ref[...]
    h1 = jnp.dot(x, w1_ref[...], preferred_element_type=jnp.float32) + b1_ref[...]
    h1 = jnp.maximum(h1, 0.0).astype(jnp.bfloat16)
    h2 = jnp.dot(h1, w2_ref[...], preferred_element_type=jnp.float32) + b2_ref[...]
    h2 = jnp.maximum(h2, 0.0).astype(jnp.bfloat16)
    logits = jnp.dot(h2, w3_ref[...], preferred_element_type=jnp.float32) + b3_ref[...]
    o_ref[...] = logits.astype(o_ref.dtype)


def prepare_params(params_f32):
    """One-time param prep: bf16 weights, f32 biases, last layer padded to OUT_PAD lanes."""
    w1, b1, w2, b2, w3, b3 = params_f32
    w1b = w1.astype(jnp.bfloat16)
    w2b = w2.astype(jnp.bfloat16)
    w3b = jnp.zeros((HIDDEN, OUT_PAD), jnp.bfloat16).at[:, :OUT_FEATURES].set(
        w3.astype(jnp.bfloat16))
    b1f = b1.astype(jnp.float32)
    b2f = b2.astype(jnp.float32)
    b3f = jnp.zeros((1, OUT_PAD), jnp.float32).at[:, :OUT_FEATURES].set(
        b3.astype(jnp.float32))
    return (w1b, b1f, w2b, b2f, w3b, b3f)


def neural_network_forward(x_nchw, prepared_params):
    """x_nchw: (B, 1, 32, 32). Returns logits (B, 6) float32."""
    w1, b1, w2, b2, w3p, b3p = prepared_params
    B = x_nchw.shape[0]

    # nn.Flatten(): flatten all dims except batch (row-major, same as PyTorch).
    x_flat = x_nchw.reshape(B, -1).astype(jnp.bfloat16)
    assert x_flat.shape[1] == IN_FEATURES

    # Pad batch so the (8, 128) sublane rule holds and TILE_B divides it evenly.
    b_pad = _round_up(B, 8)
    tile_b = min(TILE_B_MAX, b_pad)
    b_pad = _round_up(b_pad, tile_b)
    if b_pad != B:
        x_flat = jnp.pad(x_flat, ((0, b_pad - B), (0, 0)))

    grid = (b_pad // tile_b,)
    const = lambda shape: pl.BlockSpec(shape, lambda i: (0, 0))  # VMEM-resident weights

    out = pl.pallas_call(
        mlp_kernel,
        out_shape=jax.ShapeDtypeStruct((b_pad, OUT_PAD), jnp.float32),
        grid=grid,
        in_specs=[
            pl.BlockSpec((tile_b, IN_FEATURES), lambda i: (i, 0)),
            const((IN_FEATURES, HIDDEN)),
            const((1, HIDDEN)),
            const((HIDDEN, HIDDEN)),
            const((1, HIDDEN)),
            const((HIDDEN, OUT_PAD)),
            const((1, OUT_PAD)),
        ],
        out_specs=pl.BlockSpec((tile_b, OUT_PAD), lambda i: (i, 0)),
        compiler_params=pltpu.CompilerParams(
            dimension_semantics=("parallel",),
            vmem_limit_bytes=32 << 20,
        ),
    )(x_flat, w1, b1, w2, b2, w3p, b3p)

    return out[:B, :OUT_FEATURES]


def init_params(key):
    """Deterministic init matching nn.Linear shapes (weights stored as (in, out)), f32."""
    ks = jax.random.split(key, 6)

    def lin(kw, kb, fan_in, fan_out):
        bound = 1.0 / jnp.sqrt(fan_in)
        w = jax.random.uniform(kw, (fan_in, fan_out), jnp.float32, -bound, bound)
        b = jax.random.uniform(kb, (1, fan_out), jnp.float32, -bound, bound)
        return w, b

    w1, b1 = lin(ks[0], ks[1], IN_FEATURES, HIDDEN)
    w2, b2 = lin(ks[2], ks[3], HIDDEN, HIDDEN)
    w3, b3 = lin(ks[4], ks[5], HIDDEN, OUT_FEATURES)
    return (w1, b1, w2, b2, w3, b3)


if __name__ == "__main__":
    key = jax.random.PRNGKey(0)
    k_x, k_p = jax.random.split(key)
    B = 8
    x = jax.random.normal(k_x, (B, 1, 32, 32), jnp.float32)  # NCHW, like PyTorch

    params_f32 = init_params(k_p)
    prepared = prepare_params(params_f32)   # one-time: bf16 cast + lane padding

    logits = neural_network_forward(x, prepared)
    logits = jax.block_until_ready(logits)
    assert logits.shape == (B, OUT_FEATURES)

    # Reference 1: same bf16/f32-accum recipe in pure JAX (tight tolerance).
    w1b, b1f, w2b, b2f, w3b, b3f = prepared
    xb = x.reshape(B, -1).astype(jnp.bfloat16)
    r = jnp.maximum(jnp.dot(xb, w1b, preferred_element_type=jnp.float32) + b1f, 0.0)
    r = r.astype(jnp.bfloat16)
    r = jnp.maximum(jnp.dot(r, w2b, preferred_element_type=jnp.float32) + b2f, 0.0)
    r = r.astype(jnp.bfloat16)
    ref_bf16 = (jnp.dot(r, w3b, preferred_element_type=jnp.float32) + b3f)[:, :OUT_FEATURES]
    assert jnp.allclose(logits, ref_bf16, atol=1e-2, rtol=1e-2)

    # Reference 2: full-f32 PyTorch-equivalent math (loose tolerance for bf16 quantization).
    w1, b1, w2, b2, w3, b3 = params_f32
    xf = x.reshape(B, -1)
    ref = jnp.maximum(xf @ w1 + b1, 0.0)
    ref = jnp.maximum(ref @ w2 + b2, 0.0)
    ref = ref @ w3 + b3
    assert jnp.allclose(logits, ref, atol=5e-2, rtol=5e-2)

    print("KERNEL_OK")
</pallas_src>

<mosaic_0001>
module attributes {stable_mosaic.version = 11 : i64} {
  func.func @mlp_kernel(%arg0: i32, %arg1: memref<8x1024xbf16, #tpu.memory_space<vmem>>, %arg2: memref<1024x512xbf16, #tpu.memory_space<vmem>>, %arg3: memref<1x512xf32, #tpu.memory_space<vmem>>, %arg4: memref<512x512xbf16, #tpu.memory_space<vmem>>, %arg5: memref<1x512xf32, #tpu.memory_space<vmem>>, %arg6: memref<512x128xbf16, #tpu.memory_space<vmem>>, %arg7: memref<1x128xf32, #tpu.memory_space<vmem>>, %arg8: memref<8x128xf32, #tpu.memory_space<vmem>>) attributes {dimension_semantics = [#tpu.dimension_semantics<parallel>], iteration_bounds = array<i64: 1>, scalar_prefetch = 0 : i64, scratch_operands = 0 : i64, tpu.core_type = #tpu.core_type<tc>, window_params = [{transform_indices = @transform_0, window_bounds = array<i64: 8, 1024>}, {pipeline_mode = #tpu.pipeline_mode<synchronous>, transform_indices = @transform_1, window_bounds = array<i64: 1024, 512>}, {pipeline_mode = #tpu.pipeline_mode<synchronous>, transform_indices = @transform_2, window_bounds = array<i64: 1, 512>}, {pipeline_mode = #tpu.pipeline_mode<synchronous>, transform_indices = @transform_3, window_bounds = array<i64: 512, 512>}, {pipeline_mode = #tpu.pipeline_mode<synchronous>, transform_indices = @transform_4, window_bounds = array<i64: 1, 512>}, {pipeline_mode = #tpu.pipeline_mode<synchronous>, transform_indices = @transform_5, window_bounds = array<i64: 512, 128>}, {pipeline_mode = #tpu.pipeline_mode<synchronous>, transform_indices = @transform_6, window_bounds = array<i64: 1, 128>}, {transform_indices = @transform_7, window_bounds = array<i64: 8, 128>}]} {
    %c0 = arith.constant 0 : index
    %c0_0 = arith.constant 0 : index
    %0 = vector.load %arg1[%c0, %c0_0] : memref<8x1024xbf16, #tpu.memory_space<vmem>>, vector<8x1024xbf16>
    %c0_1 = arith.constant 0 : index
    %c0_2 = arith.constant 0 : index
    %1 = vector.load %arg2[%c0_1, %c0_2] : memref<1024x512xbf16, #tpu.memory_space<vmem>>, vector<1024x512xbf16>
    %cst = arith.constant dense<0.000000e+00> : vector<8x512xf32>
    %2 = tpu.matmul %0, %1, %cst {dimension_numbers = #tpu.dot_dimension_numbers<[1], [0], [0], [1], [0, 0, 1, 1], [], []>} : vector<8x1024xbf16>, vector<1024x512xbf16>, vector<8x512xf32> -> vector<8x512xf32>
    %c0_3 = arith.constant 0 : index
    %c0_4 = arith.constant 0 : index
    %3 = vector.load %arg3[%c0_3, %c0_4] : memref<1x512xf32, #tpu.memory_space<vmem>>, vector<1x512xf32>
    %4 = vector.broadcast %3 : vector<1x512xf32> to vector<8x512xf32>
    %5 = arith.addf %2, %4 : vector<8x512xf32>
    %cst_5 = arith.constant 0.000000e+00 : f32
    %6 = vector.broadcast %cst_5 : f32 to vector<8x512xf32>
    %7 = arith.maximumf %5, %6 : vector<8x512xf32>
    %8 = arith.truncf %7 : vector<8x512xf32> to vector<8x512xbf16>
    %c0_6 = arith.constant 0 : index
    %c0_7 = arith.constant 0 : index
    %9 = vector.load %arg4[%c0_6, %c0_7] : memref<512x512xbf16, #tpu.memory_space<vmem>>, vector<512x512xbf16>
    %cst_8 = arith.constant dense<0.000000e+00> : vector<8x512xf32>
    %10 = tpu.matmul %8, %9, %cst_8 {dimension_numbers = #tpu.dot_dimension_numbers<[1], [0], [0], [1], [0, 0, 1, 1], [], []>} : vector<8x512xbf16>, vector<512x512xbf16>, vector<8x512xf32> -> vector<8x512xf32>
    %c0_9 = arith.constant 0 : index
    %c0_10 = arith.constant 0 : index
    %11 = vector.load %arg5[%c0_9, %c0_10] : memref<1x512xf32, #tpu.memory_space<vmem>>, vector<1x512xf32>
    %12 = vector.broadcast %11 : vector<1x512xf32> to vector<8x512xf32>
    %13 = arith.addf %10, %12 : vector<8x512xf32>
    %cst_11 = arith.constant 0.000000e+00 : f32
    %14 = vector.broadcast %cst_11 : f32 to vector<8x512xf32>
    %15 = arith.maximumf %13, %14 : vector<8x512xf32>
    %16 = arith.truncf %15 : vector<8x512xf32> to vector<8x512xbf16>
    %c0_12 = arith.constant 0 : index
    %c0_13 = arith.constant 0 : index
    %17 = vector.load %arg6[%c0_12, %c0_13] : memref<512x128xbf16, #tpu.memory_space<vmem>>, vector<512x128xbf16>
    %cst_14 = arith.constant dense<0.000000e+00> : vector<8x128xf32>
    %18 = tpu.matmul %16, %17, %cst_14 {dimension_numbers = #tpu.dot_dimension_numbers<[1], [0], [0], [1], [0, 0, 1, 1], [], []>} : vector<8x512xbf16>, vector<512x128xbf16>, vector<8x128xf32> -> vector<8x128xf32>
    %c0_15 = arith.constant 0 : index
    %c0_16 = arith.constant 0 : index
    %19 = vector.load %arg7[%c0_15, %c0_16] : memref<1x128xf32, #tpu.memory_space<vmem>>, vector<1x128xf32>
    %20 = vector.broadcast %19 : vector<1x128xf32> to vector<8x128xf32>
    %21 = arith.addf %18, %20 : vector<8x128xf32>
    %c0_17 = arith.constant 0 : index
    %c0_18 = arith.constant 0 : index
    %22 = vector.load %arg8[%c0_17, %c0_18] : memref<8x128xf32, #tpu.memory_space<vmem>>, vector<8x128xf32>
    tpu.vector_store %arg8[%c0_17, %c0_18], %21 {strides = array<i32>} : memref<8x128xf32, #tpu.memory_space<vmem>>, vector<8x128xf32>,
    return
  }
  func.func @transform_0(%arg0: i32) -> (i32, i32) {
    %c0_i32 = arith.constant 0 : i32
    %c0_i32_0 = arith.constant 0 : i32
    return %arg0, %c0_i32 : i32, i32
  }
  func.func @transform_1(%arg0: i32) -> (i32, i32) {
    %c0_i32 = arith.constant 0 : i32
    %c0_i32_0 = arith.constant 0 : i32
    %c0_i32_1 = arith.constant 0 : i32
    return %c0_i32, %c0_i32_0 : i32, i32
  }
  func.func @transform_2(%arg0: i32) -> (i32, i32) {
    %c0_i32 = arith.constant 0 : i32
    %c0_i32_0 = arith.constant 0 : i32
    %c0_i32_1 = arith.constant 0 : i32
    return %c0_i32, %c0_i32_0 : i32, i32
  }
  func.func @transform_3(%arg0: i32) -> (i32, i32) {
    %c0_i32 = arith.constant 0 : i32
    %c0_i32_0 = arith.constant 0 : i32
    %c0_i32_1 = arith.constant 0 : i32
    return %c0_i32, %c0_i32_0 : i32, i32
  }
  func.func @transform_4(%arg0: i32) -> (i32, i32) {
    %c0_i32 = arith.constant 0 : i32
    %c0_i32_0 = arith.constant 0 : i32
    %c0_i32_1 = arith.constant 0 : i32
    return %c0_i32, %c0_i32_0 : i32, i32
  }
  func.func @transform_5(%arg0: i32) -> (i32, i32) {
    %c0_i32 = arith.constant 0 : i32
    %c0_i32_0 = arith.constant 0 : i32
    %c0_i32_1 = arith.constant 0 : i32
    return %c0_i32, %c0_i32_0 : i32, i32
  }
  func.func @transform_6(%arg0: i32) -> (i32, i32) {
    %c0_i32 = arith.constant 0 : i32
    %c0_i32_0 = arith.constant 0 : i32
    %c0_i32_1 = arith.constant 0 : i32
    return %c0_i32, %c0_i32_0 : i32, i32
  }
  func.func @transform_7(%arg0: i32) -> (i32, i32) {
    %c0_i32 = arith.constant 0 : i32
    %c0_i32_0 = arith.constant 0 : i32
    return %arg0, %c0_i32 : i32, i32
  }
}

</mosaic_0001>

<llo_original>
// kernel: tpu_custom_call.1
$region0: #{tpu_custom_call.1}
  #allocation0 [shape = 'u32[]', space=smem, size = 0x4, offset = 0x4, fixed_abs, tag = 'smem constant byte address 0x4 - core index']
  #allocation1 [shape = 'u32[144,128]{1,0:T(1,128)}', space=vmem, size = 0x12000, scoped, tag = 'internal scratch']
  %s0 = inlined_call_operand.hbm [shape: bf16[8,1024], index: 0, kind: input, shape index: {}]
  %s1 = inlined_call_operand.hbm [shape: bf16[1024,512], index: 1, kind: input, shape index: {}]
  %s2 = inlined_call_operand.hbm [shape: f32[1,512], index: 2, kind: input, shape index: {}]
  %s3 = inlined_call_operand.hbm [shape: bf16[512,512], index: 3, kind: input, shape index: {}]
  %s4 = inlined_call_operand.vmem [shape: f32[1,512], index: 4, kind: input, shape index: {}]
  %s5 = inlined_call_operand.hbm [shape: bf16[512,128], index: 5, kind: input, shape index: {}]
  %s6 = inlined_call_operand.vmem [shape: f32[1,128], index: 6, kind: input, shape index: {}]
  %s7 = inlined_call_operand.hbm [shape: f32[8,128], index: 7, kind: output, shape index: {}]
  %s8 = sld [smem:[#allocation0]]
  $region58: #{tpu_custom_call.1} parent=0
    _
  %s10 = ssub.s32 1, %s8
  %s11 = scalar_select 0, %s10, %s8
  $region1: #{tpu_custom_call.1} parent=0
    #allocation2 [shape = 'u8[16384]{0}', space=vmem, size = 0x4000, scoped, tag = 'input window, operand 0, single buffered']
    #allocation3 [shape = 's32[1]{0}', space=sflag, size = 0x4, scoped, tag = 'scoped memory for tpu_custom_call.1']
    #allocation4 [shape = 's32[1]{0}', space=sflag, size = 0x4, scoped, tag = 'scoped memory for tpu_custom_call.1']
    #allocation5 [shape = 'u8[1048576]{0}', space=vmem, size = 0x100000, scoped, tag = 'input window, operand 1, single buffered']
    #allocation6 [shape = 's32[1]{0}', space=sflag, size = 0x4, scoped, tag = 'scoped memory for tpu_custom_call.1']
    #allocation7 [shape = 'u8[2048]{0}', space=vmem, size = 0x800, scoped, tag = 'input window, operand 2, single buffered']
    #allocation8 [shape = 'u8[524288]{0}', space=vmem, size = 0x80000, scoped, tag = 'input window, operand 3, single buffered']
    #allocation9 [shape = 's32[1]{0}', space=sflag, size = 0x4, scoped, tag = 'scoped memory for tpu_custom_call.1']
    #allocation10 [shape = 'u8[131072]{0}', space=vmem, size = 0x20000, scoped, tag = 'input window, operand 5, single buffered']
    #allocation11 [shape = 'u8[4096]{0}', space=vmem, size = 0x1000, scoped, tag = 'output window, operand 0, single buffered']
    %12 = vsyncpa [#allocation3], 0
    %13 = vsyncpa [#allocation6], 0
    %14 = vsyncpa [#allocation9], 0
    %15 = vsyncpa [#allocation4], 0
    // Predicated region
    $region2: #{tpu_custom_call.1} parent=1 // pred_check
      _
    $region3: #{tpu_custom_call.1} parent=1 // pred_check_branch
      %17 = sbr.rel (0) target = $region5
    $region4: #{tpu_custom_call.1} parent=1 // pred_region
      %s19 = ssub.s32 512, 512
      %20 = vsyncadd [#allocation3], %s19
      %s22 = sshll.u32 [#allocation2], 4
      %s23 = int_to_ptr.vmem [resolvable:$true] %s22
      %25 = dma.hbm_to_vmem [thread:$0]  %s0, 512, %s23, [#allocation3]
    $region5: #{tpu_custom_call.1} parent=1 // pred_fallthru
      _
    // Predicated region
    $region6: #{tpu_custom_call.1} parent=1 // pred_check
      _
    $region7: #{tpu_custom_call.1} parent=1 // pred_check_branch
      %27 = sbr.rel (0) target = $region9
    $region8: #{tpu_custom_call.1} parent=1 // pred_region
      %s29 = ssub.s32 32768, 32768
      %30 = vsyncadd [#allocation6], %s29
      %s31 = sshll.u32 [#allocation5], 4
      %s32 = int_to_ptr.vmem [resolvable:$true] %s31
      %37 = dma.hbm_to_vmem [thread:$0]  %s1, 32768, %s32, [#allocation6], 256, 256, 16
    $region9: #{tpu_custom_call.1} parent=1 // pred_fallthru
      _
    // Predicated region
    $region10: #{tpu_custom_call.1} parent=1 // pred_check
      _
    $region11: #{tpu_custom_call.1} parent=1 // pred_check_branch
      %39 = sbr.rel (0) target = $region13
    $region12: #{tpu_custom_call.1} parent=1 // pred_region
      %s41 = ssub.s32 64, 64
      %42 = vsyncadd [#allocation6], %s41
      %s44 = sshll.u32 [#allocation7], 4
      %s45 = int_to_ptr.vmem [resolvable:$true] %s44
      %47 = dma.hbm_to_vmem [thread:$0]  %s2, 64, %s45, [#allocation6]
    $region13: #{tpu_custom_call.1} parent=1 // pred_fallthru
      _
    // Predicated region
    $region14: #{tpu_custom_call.1} parent=1 // pred_check
      _
    $region15: #{tpu_custom_call.1} parent=1 // pred_check_branch
      %49 = sbr.rel (0) target = $region17
    $region16: #{tpu_custom_call.1} parent=1 // pred_region
      %s51 = ssub.s32 16384, 16384
      %52 = vsyncadd [#allocation9], %s51
      %s53 = sshll.u32 [#allocation8], 4
      %s54 = int_to_ptr.vmem [resolvable:$true] %s53
      %59 = dma.hbm_to_vmem [thread:$0]  %s3, 16384, %s54, [#allocation9], 256, 256, 16
    $region17: #{tpu_custom_call.1} parent=1 // pred_fallthru
      _
    // Predicated region
    $region18: #{tpu_custom_call.1} parent=1 // pred_check
      _
    $region19: #{tpu_custom_call.1} parent=1 // pred_check_branch
      %61 = sbr.rel (0) target = $region21
    $region20: #{tpu_custom_call.1} parent=1 // pred_region
      _
    $region21: #{tpu_custom_call.1} parent=1 // pred_fallthru
      _
    // Predicated region
    $region22: #{tpu_custom_call.1} parent=1 // pred_check
      _
    $region23: #{tpu_custom_call.1} parent=1 // pred_check_branch
      %63 = sbr.rel (0) target = $region25
    $region24: #{tpu_custom_call.1} parent=1 // pred_region
      %s65 = ssub.s32 4096, 4096
      %66 = vsyncadd [#allocation9], %s65
      %s67 = sshll.u32 [#allocation10], 4
      %s68 = int_to_ptr.vmem [resolvable:$true] %s67
      %73 = dma.hbm_to_vmem [thread:$0]  %s5, 4096, %s68, [#allocation9], 64, 64, 4
    $region25: #{tpu_custom_call.1} parent=1 // pred_fallthru
      _
    // Predicated region
    $region26: #{tpu_custom_call.1} parent=1 // pred_check
      _
    $region27: #{tpu_custom_call.1} parent=1 // pred_check_branch
      %75 = sbr.rel (0) target = $region29
    $region28: #{tpu_custom_call.1} parent=1 // pred_region
      _
    $region29: #{tpu_custom_call.1} parent=1 // pred_fallthru
      _
    // Predicated region
    $region30: #{tpu_custom_call.1} parent=1 // pred_check
      _
    $region31: #{tpu_custom_call.1} parent=1 // pred_check_branch
      %77 = sbr.rel (0) target = $region33
    $region32: #{tpu_custom_call.1} parent=1 // pred_region
      %78 = dma.done [#allocation3], 512
    $region33: #{tpu_custom_call.1} parent=1 // pred_fallthru
      _
    // Predicated region
    $region34: #{tpu_custom_call.1} parent=1 // pred_check
      _
    $region35: #{tpu_custom_call.1} parent=1 // pred_check_branch
      %80 = sbr.rel (0) target = $region37
    $region36: #{tpu_custom_call.1} parent=1 // pred_region
      %81 = dma.done [#allocation6], 32768
    $region37: #{tpu_custom_call.1} parent=1 // pred_fallthru
      _
    // Predicated region
    $region38: #{tpu_custom_call.1} parent=1 // pred_check
      _
    $region39: #{tpu_custom_call.1} parent=1 // pred_check_branch
      %83 = sbr.rel (0) target = $region41
    $region40: #{tpu_custom_call.1} parent=1 // pred_region
      %84 = dma.done [#allocation6], 64
    $region41: #{tpu_custom_call.1} parent=1 // pred_fallthru
      _
    // Predicated region
    $region42: #{tpu_custom_call.1} parent=1 // pred_check
      _
    $region43: #{tpu_custom_call.1} parent=1 // pred_check_branch
      %86 = sbr.rel (0) target = $region45
    $region44: #{tpu_custom_call.1} parent=1 // pred_region
      %87 = dma.done [#allocation9], 16384
    $region45: #{tpu_custom_call.1} parent=1 // pred_fallthru
      _
    // Predicated region
    $region46: #{tpu_custom_call.1} parent=1 // pred_check
      _
    $region47: #{tpu_custom_call.1} parent=1 // pred_check_branch
      %89 = sbr.rel (0) target = $region49
    $region48: #{tpu_custom_call.1} parent=1 // pred_region
      %90 = dma.done [#allocation9], 4096
    $region49: #{tpu_custom_call.1} parent=1 // pred_fallthru
      _
    %v92 = vld [vmem:[#allocation2] sm:$0xff]
    %v93 = vld [vmem:[#allocation2 + $0x8] sm:$0xff]
    %v94 = vld [vmem:[#allocation2 + $0x10] sm:$0xff]
    %v95 = vld [vmem:[#allocation2 + $0x18] sm:$0xff]
    %v96 = vld [vmem:[#allocation5] sm:$0xff]
    %v97 = vld [vmem:[#allocation5 + $0x8] sm:$0xff]
    %v98 = vld [vmem:[#allocation5 + $0x10] sm:$0xff]
    %v99 = vld [vmem:[#allocation5 + $0x18] sm:$0xff]
    %v100 = vld [vmem:[#allocation5 + $0x20] sm:$0xff]
    %v101 = vld [vmem:[#allocation5 + $0x28] sm:$0xff]
    %v102 = vld [vmem:[#allocation5 + $0x30] sm:$0xff]
    %v103 = vld [vmem:[#allocation5 + $0x38] sm:$0xff]
    %v104 = vld [vmem:[#allocation5 + $0x40] sm:$0xff]
    %v105 = vld [vmem:[#allocation5 + $0x48] sm:$0xff]
    %v106 = vld [vmem:[#allocation5 + $0x50] sm:$0xff]
    %v107 = vld [vmem:[#allocation5 + $0x58] sm:$0xff]
    %v108 = vld [vmem:[#allocation5 + $0x60] sm:$0xff]
    %v109 = vld [vmem:[#allocation5 + $0x68] sm:$0xff]
    %v110 = vld [vmem:[#allocation5 + $0x70] sm:$0xff]
    %v111 = vld [vmem:[#allocation5 + $0x78] sm:$0xff]
    %v112 = vld [vmem:[#allocation5 + $0x80] sm:$0xff]
    %v113 = vld [vmem:[#allocation5 + $0x88] sm:$0xff]
    %v114 = vld [vmem:[#allocation5 + $0x90] sm:$0xff]
    %v115 = vld [vmem:[#allocation5 + $0x98] sm:$0xff]
    %v116 = vld [vmem:[#allocation5 + $0xa0] sm:$0xff]
    %v117 = vld [vmem:[#allocation5 + $0xa8] sm:$0xff]
    %v118 = vld [vmem:[#allocation5 + $0xb0] sm:$0xff]
    %v119 = vld [vmem:[#allocation5 + $0xb8] sm:$0xff]
    %v120 = vld [vmem:[#allocation5 + $0xc0] sm:$0xff]
    %v121 = vld [vmem:[#allocation5 + $0xc8] sm:$0xff]
    %v122 = vld [vmem:[#allocation5 + $0xd0] sm:$0xff]
    %v123 = vld [vmem:[#allocation5 + $0xd8] sm:$0xff]
    %v124 = vld [vmem:[#allocation5 + $0xe0] sm:$0xff]
    %v125 = vld [vmem:[#allocation5 + $0xe8] sm:$0xff]
    %v126 = vld [vmem:[#allocation5 + $0xf0] sm:$0xff]
    %v127 = vld [vmem:[#allocation5 + $0xf8] sm:$0xff]
    %v128 = vld [vmem:[#allocation5 + $0x100] sm:$0xff]
    %v129 = vld [vmem:[#allocation5 + $0x108] sm:$0xff]
    %v130 = vld [vmem:[#allocation5 + $0x110] sm:$0xff]
    %v131 = vld [vmem:[#allocation5 + $0x118] sm:$0xff]
    %v132 = vld [vmem:[#allocation5 + $0x120] sm:$0xff]
    %v133 = vld [vmem:[#allocation5 + $0x128] sm:$0xff]
    %v134 = vld [vmem:[#allocation5 + $0x130] sm:$0xff]
    %v135 = vld [vmem:[#allocation5 + $0x138] sm:$0xff]
    %v136 = vld [vmem:[#allocation5 + $0x140] sm:$0xff]
    %v137 = vld [vmem:[#allocation5 + $0x148] sm:$0xff]
    %v138 = vld [vmem:[#allocation5 + $0x150] sm:$0xff]
    %v139 = vld [vmem:[#allocation5 + $0x158] sm:$0xff]
    %v140 = vld [vmem:[#allocation5 + $0x160] sm:$0xff]
    %v141 = vld [vmem:[#allocation5 + $0x168] sm:$0xff]
    %v142 = vld [vmem:[#allocation5 + $0x170] sm:$0xff]
    %v143 = vld [vmem:[#allocation5 + $0x178] sm:$0xff]
    %v144 = vld [vmem:[#allocation5 + $0x180] sm:$0xff]
    %v145 = vld [vmem:[#allocation5 + $0x188] sm:$0xff]
    %v146 = vld [vmem:[#allocation5 + $0x190] sm:$0xff]
    %v147 = vld [vmem:[#allocation5 + $0x198] sm:$0xff]
    %v148 = vld [vmem:[#allocation5 + $0x1a0] sm:$0xff]
    %v149 = vld [vmem:[#allocation5 + $0x1a8] sm:$0xff]
    %v150 = vld [vmem:[#allocation5 + $0x1b0] sm:$0xff]
    %v151 = vld [vmem:[#allocation5 + $0x1b8] sm:$0xff]
    %v152 = vld [vmem:[#allocation5 + $0x1c0] sm:$0xff]
    %v153 = vld [vmem:[#allocation5 + $0x1c8] sm:$0xff]
    %v154 = vld [vmem:[#allocation5 + $0x1d0] sm:$0xff]
    %v155 = vld [vmem:[#allocation5 + $0x1d8] sm:$0xff]
    %v156 = vld [vmem:[#allocation5 + $0x1e0] sm:$0xff]
    %v157 = vld [vmem:[#allocation5 + $0x1e8] sm:$0xff]
    %v158 = vld [vmem:[#allocation5 + $0x1f0] sm:$0xff]
    %v159 = vld [vmem:[#allocation5 + $0x1f8] sm:$0xff]
    %v160 = vld [vmem:[#allocation5 + $0x200] sm:$0xff]
    %v161 = vld [vmem:[#allocation5 + $0x208] sm:$0xff]
    %v162 = vld [vmem:[#allocation5 + $0x210] sm:$0xff]
    %v163 = vld [vmem:[#allocation5 + $0x218] sm:$0xff]
    %v164 = vld [vmem:[#allocation5 + $0x220] sm:$0xff]
    %v165 = vld [vmem:[#allocation5 + $0x228] sm:$0xff]
    %v166 = vld [vmem:[#allocation5 + $0x230] sm:$0xff]
    %v167 = vld [vmem:[#allocation5 + $0x238] sm:$0xff]
    %v168 = vld [vmem:[#allocation5 + $0x240] sm:$0xff]
    %v169 = vld [vmem:[#allocation5 + $0x248] sm:$0xff]
    %v170 = vld [vmem:[#allocation5 + $0x250] sm:$0xff]
    %v171 = vld [vmem:[#allocation5 + $0x258] sm:$0xff]
    %v172 = vld [vmem:[#allocation5 + $0x260] sm:$0xff]
    %v173 = vld [vmem:[#allocation5 + $0x268] sm:$0xff]
    %v174 = vld [vmem:[#allocation5 + $0x270] sm:$0xff]
    %v175 = vld [vmem:[#allocation5 + $0x278] sm:$0xff]
    %v176 = vld [vmem:[#allocation5 + $0x280] sm:$0xff]
    %v177 = vld [vmem:[#allocation5 + $0x288] sm:$0xff]
    %v178 = vld [vmem:[#allocation5 + $0x290] sm:$0xff]
    %v179 = vld [vmem:[#allocation5 + $0x298] sm:$0xff]
    %v180 = vld [vmem:[#allocation5 + $0x2a0] sm:$0xff]
    %v181 = vld [vmem:[#allocation5 + $0x2a8] sm:$0xff]
    %v182 = vld [vmem:[#allocation5 + $0x2b0] sm:$0xff]
    %v183 = vld [vmem:[#allocation5 + $0x2b8] sm:$0xff]
    %v184 = vld [vmem:[#allocation5 + $0x2c0] sm:$0xff]
    %v185 = vld [vmem:[#allocation5 + $0x2c8] sm:$0xff]
    %v186 = vld [vmem:[#allocation5 + $0x2d0] sm:$0xff]
    %v187 = vld [vmem:[#allocation5 + $0x2d8] sm:$0xff]
    %v188 = vld [vmem:[#allocation5 + $0x2e0] sm:$0xff]
    %v189 = vld [vmem:[#allocation5 + $0x2e8] sm:$0xff]
    %v190 = vld [vmem:[#allocation5 + $0x2f0] sm:$0xff]
    %v191 = vld [vmem:[#allocation5 + $0x2f8] sm:$0xff]
    %v192 = vld [vmem:[#allocation5 + $0x300] sm:$0xff]
    %v193 = vld [vmem:[#allocation5 + $0x308] sm:$0xff]
    %v194 = vld [vmem:[#allocation5 + $0x310] sm:$0xff]
    %v195 = vld [vmem:[#allocation5 + $0x318] sm:$0xff]
    %v196 = vld [vmem:[#allocation5 + $0x320] sm:$0xff]
    %v197 = vld [vmem:[#allocation5 + $0x328] sm:$0xff]
    %v198 = vld [vmem:[#allocation5 + $0x330] sm:$0xff]
    %v199 = vld [vmem:[#allocation5 + $0x338] sm:$0xff]
    %v200 = vld [vmem:[#allocation5 + $0x340] sm:$0xff]
    %v201 = vld [vmem:[#allocation5 + $0x348] sm:$0xff]
    %v202 = vld [vmem:[#allocation5 + $0x350] sm:$0xff]
    %v203 = vld [vmem:[#allocation5 + $0x358] sm:$0xff]
    %v204 = vld [vmem:[#allocation5 + $0x360] sm:$0xff]
    %v205 = vld [vmem:[#allocation5 + $0x368] sm:$0xff]
    %v206 = vld [vmem:[#allocation5 + $0x370] sm:$0xff]
    %v207 = vld [vmem:[#allocation5 + $0x378] sm:$0xff]
    %v208 = vld [vmem:[#allocation5 + $0x380] sm:$0xff]
    %v209 = vld [vmem:[#allocation5 + $0x388] sm:$0xff]
    %v210 = vld [vmem:[#allocation5 + $0x390] sm:$0xff]
    %v211 = vld [vmem:[#allocation5 + $0x398] sm:$0xff]
    %v212 = vld [vmem:[#allocation5 + $0x3a0] sm:$0xff]
    %v213 = vld [vmem:[#allocation5 + $0x3a8] sm:$0xff]
    %v214 = vld [vmem:[#allocation5 + $0x3b0] sm:$0xff]
    %v215 = vld [vmem:[#allocation5 + $0x3b8] sm:$0xff]
    %v216 = vld [vmem:[#allocation5 + $0x3c0] sm:$0xff]
    %v217 = vld [vmem:[#allocation5 + $0x3c8] sm:$0xff]
    %v218 = vld [vmem:[#allocation5 + $0x3d0] sm:$0xff]
    %v219 = vld [vmem:[#allocation5 + $0x3d8] sm:$0xff]
    %v220 = vld [vmem:[#allocation5 + $0x3e0] sm:$0xff]
    %v221 = vld [vmem:[#allocation5 + $0x3e8] sm:$0xff]
    %v222 = vld [vmem:[#allocation5 + $0x3f0] sm:$0xff]
    %v223 = vld [vmem:[#allocation5 + $0x3f8] sm:$0xff]
    %v224 = vld [vmem:[#allocation5 + $0x400] sm:$0xff]
    %v225 = vld [vmem:[#allocation5 + $0x408] sm:$0xff]
    %v226 = vld [vmem:[#allocation5 + $0x410] sm:$0xff]
    %v227 = vld [vmem:[#allocation5 + $0x418] sm:$0xff]
    %v228 = vld [vmem:[#allocation5 + $0x420] sm:$0xff]
    %v229 = vld [vmem:[#allocation5 + $0x428] sm:$0xff]
    %v230 = vld [vmem:[#allocation5 + $0x430] sm:$0xff]
    %v231 = vld [vmem:[#allocation5 + $0x438] sm:$0xff]
    %v232 = vld [vmem:[#allocation5 + $0x440] sm:$0xff]
    %v233 = vld [vmem:[#allocation5 + $0x448] sm:$0xff]
    %v234 = vld [vmem:[#allocation5 + $0x450] sm:$0xff]
    %v235 = vld [vmem:[#allocation5 + $0x458] sm:$0xff]
    %v236 = vld [vmem:[#allocation5 + $0x460] sm:$0xff]
    %v237 = vld [vmem:[#allocation5 + $0x468] sm:$0xff]
    %v238 = vld [vmem:[#allocation5 + $0x470] sm:$0xff]
    %v239 = vld [vmem:[#allocation5 + $0x478] sm:$0xff]
    %v240 = vld [vmem:[#allocation5 + $0x480] sm:$0xff]
    %v241 = vld [vmem:[#allocation5 + $0x488] sm:$0xff]
    %v242 = vld [vmem:[#allocation5 + $0x490] sm:$0xff]
    %v243 = vld [vmem:[#allocation5 + $0x498] sm:$0xff]
    %v244 = vld [vmem:[#allocation5 + $0x4a0] sm:$0xff]
    %v245 = vld [vmem:[#allocation5 + $0x4a8] sm:$0xff]
    %v246 = vld [vmem:[#allocation5 + $0x4b0] sm:$0xff]
    %v247 = vld [vmem:[#allocation5 + $0x4b8] sm:$0xff]
    %v248 = vld [vmem:[#allocation5 + $0x4c0] sm:$0xff]
    %v249 = vld [vmem:[#allocation5 + $0x4c8] sm:$0xff]
    %v250 = vld [vmem:[#allocation5 + $0x4d0] sm:$0xff]
    %v251 = vld [vmem:[#allocation5 + $0x4d8] sm:$0xff]
    %v252 = vld [vmem:[#allocation5 + $0x4e0] sm:$0xff]
    %v253 = vld [vmem:[#allocation5 + $0x4e8] sm:$0xff]
    %v254 = vld [vmem:[#allocation5 + $0x4f0] sm:$0xff]
    %v255 = vld [vmem:[#allocation5 + $0x4f8] sm:$0xff]
    %v256 = vld [vmem:[#allocation5 + $0x500] sm:$0xff]
    %v257 = vld [vmem:[#allocation5 + $0x508] sm:$0xff]
    %v258 = vld [vmem:[#allocation5 + $0x510] sm:$0xff]
    %v259 = vld [vmem:[#allocation5 + $0x518] sm:$0xff]
    %v260 = vld [vmem:[#allocation5 + $0x520] sm:$0xff]
    %v261 = vld [vmem:[#allocation5 + $0x528] sm:$0xff]
    %v262 = vld [vmem:[#allocation5 + $0x530] sm:$0xff]
    %v263 = vld [vmem:[#allocation5 + $0x538] sm:$0xff]
    %v264 = vld [vmem:[#allocation5 + $0x540] sm:$0xff]
    %v265 = vld [vmem:[#allocation5 + $0x548] sm:$0xff]
    %v266 = vld [vmem:[#allocation5 + $0x550] sm:$0xff]
    %v267 = vld [vmem:[#allocation5 + $0x558] sm:$0xff]
    %v268 = vld [vmem:[#allocation5 + $0x560] sm:$0xff]
    %v269 = vld [vmem:[#allocation5 + $0x568] sm:$0xff]
    %v270 = vld [vmem:[#allocation5 + $0x570] sm:$0xff]
    %v271 = vld [vmem:[#allocation5 + $0x578] sm:$0xff]
    %v272 = vld [vmem:[#allocation5 + $0x580] sm:$0xff]
    %v273 = vld [vmem:[#allocation5 + $0x588] sm:$0xff]
    %v274 = vld [vmem:[#allocation5 + $0x590] sm:$0xff]
    %v275 = vld [vmem:[#allocation5 + $0x598] sm:$0xff]
    %v276 = vld [vmem:[#allocation5 + $0x5a0] sm:$0xff]
    %v277 = vld [vmem:[#allocation5 + $0x5a8] sm:$0xff]
    %v278 = vld [vmem:[#allocation5 + $0x5b0] sm:$0xff]
    %v279 = vld [vmem:[#allocation5 + $0x5b8] sm:$0xff]
    %v280 = vld [vmem:[#allocation5 + $0x5c0] sm:$0xff]
    %v281 = vld [vmem:[#allocation5 + $0x5c8] sm:$0xff]
    %v282 = vld [vmem:[#allocation5 + $0x5d0] sm:$0xff]
    %v283 = vld [vmem:[#allocation5 + $0x5d8] sm:$0xff]
    %v284 = vld [vmem:[#allocation5 + $0x5e0] sm:$0xff]
    %v285 = vld [vmem:[#allocation5 + $0x5e8] sm:$0xff]
    %v286 = vld [vmem:[#allocation5 + $0x5f0] sm:$0xff]
    %v287 = vld [vmem:[#allocation5 + $0x5f8] sm:$0xff]
    %v288 = vld [vmem:[#allocation5 + $0x600] sm:$0xff]
    %v289 = vld [vmem:[#allocation5 + $0x608] sm:$0xff]
    %v290 = vld [vmem:[#allocation5 + $0x610] sm:$0xff]
    %v291 = vld [vmem:[#allocation5 + $0x618] sm:$0xff]
    %v292 = vld [vmem:[#allocation5 + $0x620] sm:$0xff]
    %v293 = vld [vmem:[#allocation5 + $0x628] sm:$0xff]
    %v294 = vld [vmem:[#allocation5 + $0x630] sm:$0xff]
    %v295 = vld [vmem:[#allocation5 + $0x638] sm:$0xff]
    %v296 = vld [vmem:[#allocation5 + $0x640] sm:$0xff]
    %v297 = vld [vmem:[#allocation5 + $0x648] sm:$0xff]
    %v298 = vld [vmem:[#allocation5 + $0x650] sm:$0xff]
    %v299 = vld [vmem:[#allocation5 + $0x658] sm:$0xff]
    %v300 = vld [vmem:[#allocation5 + $0x660] sm:$0xff]
    %v301 = vld [vmem:[#allocation5 + $0x668] sm:$0xff]
    %v302 = vld [vmem:[#allocation5 + $0x670] sm:$0xff]
    %v303 = vld [vmem:[#allocation5 + $0x678] sm:$0xff]
    %v304 = vld [vmem:[#allocation5 + $0x680] sm:$0xff]
    %v305 = vld [vmem:[#allocation5 + $0x688] sm:$0xff]
    %v306 = vld [vmem:[#allocation5 + $0x690] sm:$0xff]
    %v307 = vld [vmem:[#allocation5 + $0x698] sm:$0xff]
    %v308 = vld [vmem:[#allocation5 + $0x6a0] sm:$0xff]
    %v309 = vld [vmem:[#allocation5 + $0x6a8] sm:$0xff]
    %v310 = vld [vmem:[#allocation5 + $0x6b0] sm:$0xff]
    %v311 = vld [vmem:[#allocation5 + $0x6b8] sm:$0xff]
    %v312 = vld [vmem:[#allocation5 + $0x6c0] sm:$0xff]
    %v313 = vld [vmem:[#allocation5 + $0x6c8] sm:$0xff]
    %v314 = vld [vmem:[#allocation5 + $0x6d0] sm:$0xff]
    %v315 = vld [vmem:[#allocation5 + $0x6d8] sm:$0xff]
    %v316 = vld [vmem:[#allocation5 + $0x6e0] sm:$0xff]
    %v317 = vld [vmem:[#allocation5 + $0x6e8] sm:$0xff]
    %v318 = vld [vmem:[#allocation5 + $0x6f0] sm:$0xff]
    %v319 = vld [vmem:[#allocation5 + $0x6f8] sm:$0xff]
    %v320 = vld [vmem:[#allocation5 + $0x700] sm:$0xff]
    %v321 = vld [vmem:[#allocation5 + $0x708] sm:$0xff]
    %v322 = vld [vmem:[#allocation5 + $0x710] sm:$0xff]
    %v323 = vld [vmem:[#allocation5 + $0x718] sm:$0xff]
    %v324 = vld [vmem:[#allocation5 + $0x720] sm:$0xff]
    %v325 = vld [vmem:[#allocation5 + $0x728] sm:$0xff]
    %v326 = vld [vmem:[#allocation5 + $0x730] sm:$0xff]
    %v327 = vld [vmem:[#allocation5 + $0x738] sm:$0xff]
    %v328 = vld [vmem:[#allocation5 + $0x740] sm:$0xff]
    %v329 = vld [vmem:[#allocation5 + $0x748] sm:$0xff]
    %v330 = vld [vmem:[#allocation5 + $0x750] sm:$0xff]
    %v331 = vld [vmem:[#allocation5 + $0x758] sm:$0xff]
    %v332 = vld [vmem:[#allocation5 + $0x760] sm:$0xff]
    %v333 = vld [vmem:[#allocation5 + $0x768] sm:$0xff]
    %v334 = vld [vmem:[#allocation5 + $0x770] sm:$0xff]
    %v335 = vld [vmem:[#allocation5 + $0x778] sm:$0xff]
    %v336 = vld [vmem:[#allocation5 + $0x780] sm:$0xff]
    %v337 = vld [vmem:[#allocation5 + $0x788] sm:$0xff]
    %v338 = vld [vmem:[#allocation5 + $0x790] sm:$0xff]
    %v339 = vld [vmem:[#allocation5 + $0x798] sm:$0xff]
    %v340 = vld [vmem:[#allocation5 + $0x7a0] sm:$0xff]
    %v341 = vld [vmem:[#allocation5 + $0x7a8] sm:$0xff]
    %v342 = vld [vmem:[#allocation5 + $0x7b0] sm:$0xff]
    %v343 = vld [vmem:[#allocation5 + $0x7b8] sm:$0xff]
    %v344 = vld [vmem:[#allocation5 + $0x7c0] sm:$0xff]
    %v345 = vld [vmem:[#allocation5 + $0x7c8] sm:$0xff]
    %v346 = vld [vmem:[#allocation5 + $0x7d0] sm:$0xff]
    %v347 = vld [vmem:[#allocation5 + $0x7d8] sm:$0xff]
    %v348 = vld [vmem:[#allocation5 + $0x7e0] sm:$0xff]
    %v349 = vld [vmem:[#allocation5 + $0x7e8] sm:$0xff]
    %v350 = vld [vmem:[#allocation5 + $0x7f0] sm:$0xff]
    %v351 = vld [vmem:[#allocation5 + $0x7f8] sm:$0xff]
    %v352 = vld [vmem:[#allocation7] sm:$0xf]
    %v354 = vlaneseq
    %v355 = vshrl.u32 %v354, 7
    %v356 = vsub.s32 0, %v355
    %v357 = vrot.slane %v352, %v356
    %v358 = vlaneseq
    %v359 = vshrl.u32 %v358, 7
    %v360 = vsub.s32 1, %v359
    %v361 = vrot.slane %v352, %v360
    %v362 = vlaneseq
    %v363 = vshrl.u32 %v362, 7
    %v364 = vsub.s32 2, %v363
    %v365 = vrot.slane %v352, %v364
    %v366 = vlaneseq
    %v367 = vshrl.u32 %v366, 7
    %v368 = vsub.s32 3, %v367
    %v369 = vrot.slane %v352, %v368
    %v378 = vunpack.c.l.b16 %v92
    %v379 = vunpack.c.h.b16 %v92
    %v380 = vunpack.c.l.b16 %v93
    %v381 = vunpack.c.h.b16 %v93
    %v382 = vunpack.c.l.b16 %v94
    %v383 = vunpack.c.h.b16 %v94
    %v384 = vunpack.c.l.b16 %v95
    %v385 = vunpack.c.h.b16 %v95
    %v386 = vpack.c.b16 %v378, %v378
    %v387 = vpack.c.b16 %v379, %v379
    %v388 = vpack.c.b16 %v380, %v380
    %v389 = vpack.c.b16 %v381, %v381
    %v390 = vpack.c.b16 %v382, %v382
    %v391 = vpack.c.b16 %v383, %v383
    %v392 = vpack.c.b16 %v384, %v384
    %v393 = vpack.c.b16 %v385, %v385
    %v658 = vunpack.c.l.b16 %v96
    %v659 = vunpack.c.h.b16 %v96
    %v660 = vunpack.c.l.b16 %v97
    %v661 = vunpack.c.h.b16 %v97
    %v662 = vunpack.c.l.b16 %v98
    %v663 = vunpack.c.h.b16 %v98
    %v664 = vunpack.c.l.b16 %v99
    %v665 = vunpack.c.h.b16 %v99
    %v666 = vunpack.c.l.b16 %v100
    %v667 = vunpack.c.h.b16 %v100
    %v668 = vunpack.c.l.b16 %v101
    %v669 = vunpack.c.h.b16 %v101
    %v670 = vunpack.c.l.b16 %v102
    %v671 = vunpack.c.h.b16 %v102
    %v672 = vunpack.c.l.b16 %v103
    %v673 = vunpack.c.h.b16 %v103
    %v674 = vunpack.c.l.b16 %v104
    %v675 = vunpack.c.h.b16 %v104
    %v676 = vunpack.c.l.b16 %v105
    %v677 = vunpack.c.h.b16 %v105
    %v678 = vunpack.c.l.b16 %v106
    %v679 = vunpack.c.h.b16 %v106
    %v680 = vunpack.c.l.b16 %v107
    %v681 = vunpack.c.h.b16 %v107
    %v682 = vunpack.c.l.b16 %v108
    %v683 = vunpack.c.h.b16 %v108
    %v684 = vunpack.c.l.b16 %v109
    %v685 = vunpack.c.h.b16 %v109
    %v686 = vunpack.c.l.b16 %v110
    %v687 = vunpack.c.h.b16 %v110
    %v688 = vunpack.c.l.b16 %v111
    %v689 = vunpack.c.h.b16 %v111
    %v690 = vunpack.c.l.b16 %v112
    %v691 = vunpack.c.h.b16 %v112
    %v692 = vunpack.c.l.b16 %v113
    %v693 = vunpack.c.h.b16 %v113
    %v694 = vunpack.c.l.b16 %v114
    %v695 = vunpack.c.h.b16 %v114
    %v696 = vunpack.c.l.b16 %v115
    %v697 = vunpack.c.h.b16 %v115
    %v698 = vunpack.c.l.b16 %v116
    %v699 = vunpack.c.h.b16 %v116
    %v700 = vunpack.c.l.b16 %v117
    %v701 = vunpack.c.h.b16 %v117
    %v702 = vunpack.c.l.b16 %v118
    %v703 = vunpack.c.h.b16 %v118
    %v704 = vunpack.c.l.b16 %v119
    %v705 = vunpack.c.h.b16 %v119
    %v706 = vunpack.c.l.b16 %v120
    %v707 = vunpack.c.h.b16 %v120
    %v708 = vunpack.c.l.b16 %v121
    %v709 = vunpack.c.h.b16 %v121
    %v710 = vunpack.c.l.b16 %v122
    %v711 = vunpack.c.h.b16 %v122
    %v712 = vunpack.c.l.b16 %v123
    %v713 = vunpack.c.h.b16 %v123
    %v714 = vunpack.c.l.b16 %v124
    %v715 = vunpack.c.h.b16 %v124
    %v716 = vunpack.c.l.b16 %v125
    %v717 = vunpack.c.h.b16 %v125
    %v718 = vunpack.c.l.b16 %v126
    %v719 = vunpack.c.h.b16 %v126
    %v720 = vunpack.c.l.b16 %v127
    %v721 = vunpack.c.h.b16 %v127
    %v722 = vunpack.c.l.b16 %v128
    %v723 = vunpack.c.h.b16 %v128
    %v724 = vunpack.c.l.b16 %v129
    %v725 = vunpack.c.h.b16 %v129
    %v726 = vunpack.c.l.b16 %v130
    %v727 = vunpack.c.h.b16 %v130
    %v728 = vunpack.c.l.b16 %v131
    %v729 = vunpack.c.h.b16 %v131
    %v730 = vunpack.c.l.b16 %v132
    %v731 = vunpack.c.h.b16 %v132
    %v732 = vunpack.c.l.b16 %v133
    %v733 = vunpack.c.h.b16 %v133
    %v734 = vunpack.c.l.b16 %v134
    %v735 = vunpack.c.h.b16 %v134
    %v736 = vunpack.c.l.b16 %v135
    %v737 = vunpack.c.h.b16 %v135
    %v738 = vunpack.c.l.b16 %v136
    %v739 = vunpack.c.h.b16 %v136
    %v740 = vunpack.c.l.b16 %v137
    %v741 = vunpack.c.h.b16 %v137
    %v742 = vunpack.c.l.b16 %v138
    %v743 = vunpack.c.h.b16 %v138
    %v744 = vunpack.c.l.b16 %v139
    %v745 = vunpack.c.h.b16 %v139
    %v746 = vunpack.c.l.b16 %v140
    %v747 = vunpack.c.h.b16 %v140
    %v748 = vunpack.c.l.b16 %v141
    %v749 = vunpack.c.h.b16 %v141
    %v750 = vunpack.c.l.b16 %v142
    %v751 = vunpack.c.h.b16 %v142
    %v752 = vunpack.c.l.b16 %v143
    %v753 = vunpack.c.h.b16 %v143
    %v754 = vunpack.c.l.b16 %v144
    %v755 = vunpack.c.h.b16 %v144
    %v756 = vunpack.c.l.b16 %v145
    %v757 = vunpack.c.h.b16 %v145
    %v758 = vunpack.c.l.b16 %v146
    %v759 = vunpack.c.h.b16 %v146
    %v760 = vunpack.c.l.b16 %v147
    %v761 = vunpack.c.h.b16 %v147
    %v762 = vunpack.c.l.b16 %v148
    %v763 = vunpack.c.h.b16 %v148
    %v764 = vunpack.c.l.b16 %v149
    %v765 = vunpack.c.h.b16 %v149
    %v766 = vunpack.c.l.b16 %v150
    %v767 = vunpack.c.h.b16 %v150
    %v768 = vunpack.c.l.b16 %v151
    %v769 = vunpack.c.h.b16 %v151
    %v770 = vunpack.c.l.b16 %v152
    %v771 = vunpack.c.h.b16 %v152
    %v772 = vunpack.c.l.b16 %v153
    %v773 = vunpack.c.h.b16 %v153
    %v774 = vunpack.c.l.b16 %v154
    %v775 = vunpack.c.h.b16 %v154
    %v776 = vunpack.c.l.b16 %v155
    %v777 = vunpack.c.h.b16 %v155
    %v778 = vunpack.c.l.b16 %v156
    %v779 = vunpack.c.h.b16 %v156
    %v780 = vunpack.c.l.b16 %v157
    %v781 = vunpack.c.h.b16 %v157
    %v782 = vunpack.c.l.b16 %v158
    %v783 = vunpack.c.h.b16 %v158
    %v784 = vunpack.c.l.b16 %v159
    %v785 = vunpack.c.h.b16 %v159
    %v786 = vunpack.c.l.b16 %v160
    %v787 = vunpack.c.h.b16 %v160
    %v788 = vunpack.c.l.b16 %v161
    %v789 = vunpack.c.h.b16 %v161
    %v790 = vunpack.c.l.b16 %v162
    %v791 = vunpack.c.h.b16 %v162
    %v792 = vunpack.c.l.b16 %v163
    %v793 = vunpack.c.h.b16 %v163
    %v794 = vunpack.c.l.b16 %v164
    %v795 = vunpack.c.h.b16 %v164
    %v796 = vunpack.c.l.b16 %v165
    %v797 = vunpack.c.h.b16 %v165
    %v798 = vunpack.c.l.b16 %v166
    %v799 = vunpack.c.h.b16 %v166
    %v800 = vunpack.c.l.b16 %v167
    %v801 = vunpack.c.h.b16 %v167
    %v802 = vunpack.c.l.b16 %v168
    %v803 = vunpack.c.h.b16 %v168
    %v804 = vunpack.c.l.b16 %v169
    %v805 = vunpack.c.h.b16 %v169
    %v806 = vunpack.c.l.b16 %v170
    %v807 = vunpack.c.h.b16 %v170
    %v808 = vunpack.c.l.b16 %v171
    %v809 = vunpack.c.h.b16 %v171
    %v810 = vunpack.c.l.b16 %v172
    %v811 = vunpack.c.h.b16 %v172
    %v812 = vunpack.c.l.b16 %v173
    %v813 = vunpack.c.h.b16 %v173
    %v814 = vunpack.c.l.b16 %v174
    %v815 = vunpack.c.h.b16 %v174
    %v816 = vunpack.c.l.b16 %v175
    %v817 = vunpack.c.h.b16 %v175
    %v818 = vunpack.c.l.b16 %v176
    %v819 = vunpack.c.h.b16 %v176
    %v820 = vunpack.c.l.b16 %v177
    %v821 = vunpack.c.h.b16 %v177
    %v822 = vunpack.c.l.b16 %v178
    %v823 = vunpack.c.h.b16 %v178
    %v824 = vunpack.c.l.b16 %v179
    %v825 = vunpack.c.h.b16 %v179
    %v826 = vunpack.c.l.b16 %v180
    %v827 = vunpack.c.h.b16 %v180
    %v828 = vunpack.c.l.b16 %v181
    %v829 = vunpack.c.h.b16 %v181
    %v830 = vunpack.c.l.b16 %v182
    %v831 = vunpack.c.h.b16 %v182
    %v832 = vunpack.c.l.b16 %v183
    %v833 = vunpack.c.h.b16 %v183
    %v834 = vunpack.c.l.b16 %v184
    %v835 = vunpack.c.h.b16 %v184
    %v836 = vunpack.c.l.b16 %v185
    %v837 = vunpack.c.h.b16 %v185
    %v838 = vunpack.c.l.b16 %v186
    %v839 = vunpack.c.h.b16 %v186
    %v840 = vunpack.c.l.b16 %v187
    %v841 = vunpack.c.h.b16 %v187
    %v842 = vunpack.c.l.b16 %v188
    %v843 = vunpack.c.h.b16 %v188
    %v844 = vunpack.c.l.b16 %v189
    %v845 = vunpack.c.h.b16 %v189
    %v846 = vunpack.c.l.b16 %v190
    %v847 = vunpack.c.h.b16 %v190
    %v848 = vunpack.c.l.b16 %v191
    %v849 = vunpack.c.h.b16 %v191
    %v850 = vunpack.c.l.b16 %v192
    %v851 = vunpack.c.h.b16 %v192
    %v852 = vunpack.c.l.b16 %v193
    %v853 = vunpack.c.h.b16 %v193
    %v854 = vunpack.c.l.b16 %v194
    %v855 = vunpack.c.h.b16 %v194
    %v856 = vunpack.c.l.b16 %v195
    %v857 = vunpack.c.h.b16 %v195
    %v858 = vunpack.c.l.b16 %v196
    %v859 = vunpack.c.h.b16 %v196
    %v860 = vunpack.c.l.b16 %v197
    %v861 = vunpack.c.h.b16 %v197
    %v862 = vunpack.c.l.b16 %v198
    %v863 = vunpack.c.h.b16 %v198
    %v864 = vunpack.c.l.b16 %v199
    %v865 = vunpack.c.h.b16 %v199
    %v866 = vunpack.c.l.b16 %v200
    %v867 = vunpack.c.h.b16 %v200
    %v868 = vunpack.c.l.b16 %v201
    %v869 = vunpack.c.h.b16 %v201
    %v870 = vunpack.c.l.b16 %v202
    %v871 = vunpack.c.h.b16 %v202
    %v872 = vunpack.c.l.b16 %v203
    %v873 = vunpack.c.h.b16 %v203
    %v874 = vunpack.c.l.b16 %v204
    %v875 = vunpack.c.h.b16 %v204
    %v876 = vunpack.c.l.b16 %v205
    %v877 = vunpack.c.h.b16 %v205
    %v878 = vunpack.c.l.b16 %v206
    %v879 = vunpack.c.h.b16 %v206
    %v880 = vunpack.c.l.b16 %v207
    %v881 = vunpack.c.h.b16 %v207
    %v882 = vunpack.c.l.b16 %v208
    %v883 = vunpack.c.h.b16 %v208
    %v884 = vunpack.c.l.b16 %v209
    %v885 = vunpack.c.h.b16 %v209
    %v886 = vunpack.c.l.b16 %v210
    %v887 = vunpack.c.h.b16 %v210
    %v888 = vunpack.c.l.b16 %v211
    %v889 = vunpack.c.h.b16 %v211
    %v890 = vunpack.c.l.b16 %v212
    %v891 = vunpack.c.h.b16 %v212
    %v892 = vunpack.c.l.b16 %v213
    %v893 = vunpack.c.h.b16 %v213
    %v894 = vunpack.c.l.b16 %v214
    %v895 = vunpack.c.h.b16 %v214
    %v896 = vunpack.c.l.b16 %v215
    %v897 = vunpack.c.h.b16 %v215
    %v898 = vunpack.c.l.b16 %v216
    %v899 = vunpack.c.h.b16 %v216
    %v900 = vunpack.c.l.b16 %v217
    %v901 = vunpack.c.h.b16 %v217
    %v902 = vunpack.c.l.b16 %v218
    %v903 = vunpack.c.h.b16 %v218
    %v904 = vunpack.c.l.b16 %v219
    %v905 = vunpack.c.h.b16 %v219
    %v906 = vunpack.c.l.b16 %v220
    %v907 = vunpack.c.h.b16 %v220
    %v908 = vunpack.c.l.b16 %v221
    %v909 = vunpack.c.h.b16 %v221
    %v910 = vunpack.c.l.b16 %v222
    %v911 = vunpack.c.h.b16 %v222
    %v912 = vunpack.c.l.b16 %v223
    %v913 = vunpack.c.h.b16 %v223
    %v914 = vunpack.c.l.b16 %v224
    %v915 = vunpack.c.h.b16 %v224
    %v916 = vunpack.c.l.b16 %v225
    %v917 = vunpack.c.h.b16 %v225
    %v918 = vunpack.c.l.b16 %v226
    %v919 = vunpack.c.h.b16 %v226
    %v920 = vunpack.c.l.b16 %v227
    %v921 = vunpack.c.h.b16 %v227
    %v922 = vunpack.c.l.b16 %v228
    %v923 = vunpack.c.h.b16 %v228
    %v924 = vunpack.c.l.b16 %v229
    %v925 = vunpack.c.h.b16 %v229
    %v926 = vunpack.c.l.b16 %v230
    %v927 = vunpack.c.h.b16 %v230
    %v928 = vunpack.c.l.b16 %v231
    %v929 = vunpack.c.h.b16 %v231
    %v930 = vunpack.c.l.b16 %v232
    %v931 = vunpack.c.h.b16 %v232
    %v932 = vunpack.c.l.b16 %v233
    %v933 = vunpack.c.h.b16 %v233
    %v934 = vunpack.c.l.b16 %v234
    %v935 = vunpack.c.h.b16 %v234
    %v936 = vunpack.c.l.b16 %v235
    %v937 = vunpack.c.h.b16 %v235
    %v938 = vunpack.c.l.b16 %v236
    %v939 = vunpack.c.h.b16 %v236
    %v940 = vunpack.c.l.b16 %v237
    %v941 = vunpack.c.h.b16 %v237
    %v942 = vunpack.c.l.b16 %v238
    %v943 = vunpack.c.h.b16 %v238
    %v944 = vunpack.c.l.b16 %v239
    %v945 = vunpack.c.h.b16 %v239
    %v946 = vunpack.c.l.b16 %v240
    %v947 = vunpack.c.h.b16 %v240
    %v948 = vunpack.c.l.b16 %v241
    %v949 = vunpack.c.h.b16 %v241
    %v950 = vunpack.c.l.b16 %v242
    %v951 = vunpack.c.h.b16 %v242
    %v952 = vunpack.c.l.b16 %v243
    %v953 = vunpack.c.h.b16 %v243
    %v954 = vunpack.c.l.b16 %v244
    %v955 = vunpack.c.h.b16 %v244
    %v956 = vunpack.c.l.b16 %v245
    %v957 = vunpack.c.h.b16 %v245
    %v958 = vunpack.c.l.b16 %v246
    %v959 = vunpack.c.h.b16 %v246
    %v960 = vunpack.c.l.b16 %v247
    %v961 = vunpack.c.h.b16 %v247
    %v962 = vunpack.c.l.b16 %v248
    %v963 = vunpack.c.h.b16 %v248
    %v964 = vunpack.c.l.b16 %v249
    %v965 = vunpack.c.h.b16 %v249
    %v966 = vunpack.c.l.b16 %v250
    %v967 = vunpack.c.h.b16 %v250
    %v968 = vunpack.c.l.b16 %v251
    %v969 = vunpack.c.h.b16 %v251
    %v970 = vunpack.c.l.b16 %v252
    %v971 = vunpack.c.h.b16 %v252
    %v972 = vunpack.c.l.b16 %v253
    %v973 = vunpack.c.h.b16 %v253
    %v974 = vunpack.c.l.b16 %v254
    %v975 = vunpack.c.h.b16 %v254
    %v976 = vunpack.c.l.b16 %v255
    %v977 = vunpack.c.h.b16 %v255
    %v978 = vunpack.c.l.b16 %v256
    %v979 = vunpack.c.h.b16 %v256
    %v980 = vunpack.c.l.b16 %v257
    %v981 = vunpack.c.h.b16 %v257
    %v982 = vunpack.c.l.b16 %v258
    %v983 = vunpack.c.h.b16 %v258
    %v984 = vunpack.c.l.b16 %v259
    %v985 = vunpack.c.h.b16 %v259
    %v986 = vunpack.c.l.b16 %v260
    %v987 = vunpack.c.h.b16 %v260
    %v988 = vunpack.c.l.b16 %v261
    %v989 = vunpack.c.h.b16 %v261
    %v990 = vunpack.c.l.b16 %v262
    %v991 = vunpack.c.h.b16 %v262
    %v992 = vunpack.c.l.b16 %v263
    %v993 = vunpack.c.h.b16 %v263
    %v994 = vunpack.c.l.b16 %v264
    %v995 = vunpack.c.h.b16 %v264
    %v996 = vunpack.c.l.b16 %v265
    %v997 = vunpack.c.h.b16 %v265
    %v998 = vunpack.c.l.b16 %v266
    %v999 = vunpack.c.h.b16 %v266
    %v1000 = vunpack.c.l.b16 %v267
    %v1001 = vunpack.c.h.b16 %v267
    %v1002 = vunpack.c.l.b16 %v268
    %v1003 = vunpack.c.h.b16 %v268
    %v1004 = vunpack.c.l.b16 %v269
    %v1005 = vunpack.c.h.b16 %v269
    %v1006 = vunpack.c.l.b16 %v270
    %v1007 = vunpack.c.h.b16 %v270
    %v1008 = vunpack.c.l.b16 %v271
    %v1009 = vunpack.c.h.b16 %v271
    %v1010 = vunpack.c.l.b16 %v272
    %v1011 = vunpack.c.h.b16 %v272
    %v1012 = vunpack.c.l.b16 %v273
    %v1013 = vunpack.c.h.b16 %v273
    %v1014 = vunpack.c.l.b16 %v274
    %v1015 = vunpack.c.h.b16 %v274
    %v1016 = vunpack.c.l.b16 %v275
    %v1017 = vunpack.c.h.b16 %v275
    %v1018 = vunpack.c.l.b16 %v276
    %v1019 = vunpack.c.h.b16 %v276
    %v1020 = vunpack.c.l.b16 %v277
    %v1021 = vunpack.c.h.b16 %v277
    %v1022 = vunpack.c.l.b16 %v278
    %v1023 = vunpack.c.h.b16 %v278
    %v1024 = vunpack.c.l.b16 %v279
    %v1025 = vunpack.c.h.b16 %v279
    %v1026 = vunpack.c.l.b16 %v280
    %v1027 = vunpack.c.h.b16 %v280
    %v1028 = vunpack.c.l.b16 %v281
    %v1029 = vunpack.c.h.b16 %v281
    %v1030 = vunpack.c.l.b16 %v282
    %v1031 = vunpack.c.h.b16 %v282
    %v1032 = vunpack.c.l.b16 %v283
    %v1033 = vunpack.c.h.b16 %v283
    %v1034 = vunpack.c.l.b16 %v284
    %v1035 = vunpack.c.h.b16 %v284
    %v1036 = vunpack.c.l.b16 %v285
    %v1037 = vunpack.c.h.b16 %v285
    %v1038 = vunpack.c.l.b16 %v286
    %v1039 = vunpack.c.h.b16 %v286
    %v1040 = vunpack.c.l.b16 %v287
    %v1041 = vunpack.c.h.b16 %v287
    %v1042 = vunpack.c.l.b16 %v288
    %v1043 = vunpack.c.h.b16 %v288
    %v1044 = vunpack.c.l.b16 %v289
    %v1045 = vunpack.c.h.b16 %v289
    %v1046 = vunpack.c.l.b16 %v290
    %v1047 = vunpack.c.h.b16 %v290
    %v1048 = vunpack.c.l.b16 %v291
    %v1049 = vunpack.c.h.b16 %v291
    %v1050 = vunpack.c.l.b16 %v292
    %v1051 = vunpack.c.h.b16 %v292
    %v1052 = vunpack.c.l.b16 %v293
    %v1053 = vunpack.c.h.b16 %v293
    %v1054 = vunpack.c.l.b16 %v294
    %v1055 = vunpack.c.h.b16 %v294
    %v1056 = vunpack.c.l.b16 %v295
    %v1057 = vunpack.c.h.b16 %v295
    %v1058 = vunpack.c.l.b16 %v296
    %v1059 = vunpack.c.h.b16 %v296
    %v1060 = vunpack.c.l.b16 %v297
    %v1061 = vunpack.c.h.b16 %v297
    %v1062 = vunpack.c.l.b16 %v298
    %v1063 = vunpack.c.h.b16 %v298
    %v1064 = vunpack.c.l.b16 %v299
    %v1065 = vunpack.c.h.b16 %v299
    %v1066 = vunpack.c.l.b16 %v300
    %v1067 = vunpack.c.h.b16 %v300
    %v1068 = vunpack.c.l.b16 %v301
    %v1069 = vunpack.c.h.b16 %v301
    %v1070 = vunpack.c.l.b16 %v302
    %v1071 = vunpack.c.h.b16 %v302
    %v1072 = vunpack.c.l.b16 %v303
    %v1073 = vunpack.c.h.b16 %v303
    %v1074 = vunpack.c.l.b16 %v304
    %v1075 = vunpack.c.h.b16 %v304
    %v1076 = vunpack.c.l.b16 %v305
    %v1077 = vunpack.c.h.b16 %v305
    %v1078 = vunpack.c.l.b16 %v306
    %v1079 = vunpack.c.h.b16 %v306
    %v1080 = vunpack.c.l.b16 %v307
    %v1081 = vunpack.c.h.b16 %v307
    %v1082 = vunpack.c.l.b16 %v308
    %v1083 = vunpack.c.h.b16 %v308
    %v1084 = vunpack.c.l.b16 %v309
    %v1085 = vunpack.c.h.b16 %v309
    %v1086 = vunpack.c.l.b16 %v310
    %v1087 = vunpack.c.h.b16 %v310
    %v1088 = vunpack.c.l.b16 %v311
    %v1089 = vunpack.c.h.b16 %v311
    %v1090 = vunpack.c.l.b16 %v312
    %v1091 = vunpack.c.h.b16 %v312
    %v1092 = vunpack.c.l.b16 %v313
    %v1093 = vunpack.c.h.b16 %v313
    %v1094 = vunpack.c.l.b16 %v314
    %v1095 = vunpack.c.h.b16 %v314
    %v1096 = vunpack.c.l.b16 %v315
    %v1097 = vunpack.c.h.b16 %v315
    %v1098 = vunpack.c.l.b16 %v316
    %v1099 = vunpack.c.h.b16 %v316
    %v1100 = vunpack.c.l.b16 %v317
    %v1101 = vunpack.c.h.b16 %v317
    %v1102 = vunpack.c.l.b16 %v318
    %v1103 = vunpack.c.h.b16 %v318
    %v1104 = vunpack.c.l.b16 %v319
    %v1105 = vunpack.c.h.b16 %v319
    %v1106 = vunpack.c.l.b16 %v320
    %v1107 = vunpack.c.h.b16 %v320
    %v1108 = vunpack.c.l.b16 %v321
    %v1109 = vunpack.c.h.b16 %v321
    %v1110 = vunpack.c.l.b16 %v322
    %v1111 = vunpack.c.h.b16 %v322
    %v1112 = vunpack.c.l.b16 %v323
    %v1113 = vunpack.c.h.b16 %v323
    %v1114 = vunpack.c.l.b16 %v324
    %v1115 = vunpack.c.h.b16 %v324
    %v1116 = vunpack.c.l.b16 %v325
    %v1117 = vunpack.c.h.b16 %v325
    %v1118 = vunpack.c.l.b16 %v326
    %v1119 = vunpack.c.h.b16 %v326
    %v1120 = vunpack.c.l.b16 %v327
    %v1121 = vunpack.c.h.b16 %v327
    %v1122 = vunpack.c.l.b16 %v328
    %v1123 = vunpack.c.h.b16 %v328
    %v1124 = vunpack.c.l.b16 %v329
    %v1125 = vunpack.c.h.b16 %v329
    %v1126 = vunpack.c.l.b16 %v330
    %v1127 = vunpack.c.h.b16 %v330
    %v1128 = vunpack.c.l.b16 %v331
    %v1129 = vunpack.c.h.b16 %v331
    %v1130 = vunpack.c.l.b16 %v332
    %v1131 = vunpack.c.h.b16 %v332
    %v1132 = vunpack.c.l.b16 %v333
    %v1133 = vunpack.c.h.b16 %v333
    %v1134 = vunpack.c.l.b16 %v334
    %v1135 = vunpack.c.h.b16 %v334
    %v1136 = vunpack.c.l.b16 %v335
    %v1137 = vunpack.c.h.b16 %v335
    %v1138 = vunpack.c.l.b16 %v336
    %v1139 = vunpack.c.h.b16 %v336
    %v1140 = vunpack.c.l.b16 %v337
    %v1141 = vunpack.c.h.b16 %v337
    %v1142 = vunpack.c.l.b16 %v338
    %v1143 = vunpack.c.h.b16 %v338
    %v1144 = vunpack.c.l.b16 %v339
    %v1145 = vunpack.c.h.b16 %v339
    %v1146 = vunpack.c.l.b16 %v340
    %v1147 = vunpack.c.h.b16 %v340
    %v1148 = vunpack.c.l.b16 %v341
    %v1149 = vunpack.c.h.b16 %v341
    %v1150 = vunpack.c.l.b16 %v342
    %v1151 = vunpack.c.h.b16 %v342
    %v1152 = vunpack.c.l.b16 %v343
    %v1153 = vunpack.c.h.b16 %v343
    %v1154 = vunpack.c.l.b16 %v344
    %v1155 = vunpack.c.h.b16 %v344
    %v1156 = vunpack.c.l.b16 %v345
    %v1157 = vunpack.c.h.b16 %v345
    %v1158 = vunpack.c.l.b16 %v346
    %v1159 = vunpack.c.h.b16 %v346
    %v1160 = vunpack.c.l.b16 %v347
    %v1161 = vunpack.c.h.b16 %v347
    %v1162 = vunpack.c.l.b16 %v348
    %v1163 = vunpack.c.h.b16 %v348
    %v1164 = vunpack.c.l.b16 %v349
    %v1165 = vunpack.c.h.b16 %v349
    %v1166 = vunpack.c.l.b16 %v350
    %v1167 = vunpack.c.h.b16 %v350
    %v1168 = vunpack.c.l.b16 %v351
    %v1169 = vunpack.c.h.b16 %v351
    %v1170 = vpack.c.b16 %v662, %v658
    %v1171 = vpack.c.b16 %v663, %v659
    %v1172 = vpack.c.b16 %v664, %v660
    %v1173 = vpack.c.b16 %v665, %v661
    %v1174 = vpack.c.b16 %v670, %v666
    %v1175 = vpack.c.b16 %v671, %v667
    %v1176 = vpack.c.b16 %v672, %v668
    %v1177 = vpack.c.b16 %v673, %v669
    %v1178 = vpack.c.b16 %v678, %v674
    %v1179 = vpack.c.b16 %v679, %v675
    %v1180 = vpack.c.b16 %v680, %v676
    %v1181 = vpack.c.b16 %v681, %v677
    %v1182 = vpack.c.b16 %v686, %v682
    %v1183 = vpack.c.b16 %v687, %v683
    %v1184 = vpack.c.b16 %v688, %v684
    %v1185 = vpack.c.b16 %v689, %v685
    %v1186 = vpack.c.b16 %v694, %v690
    %v1187 = vpack.c.b16 %v695, %v691
    %v1188 = vpack.c.b16 %v696, %v692
    %v1189 = vpack.c.b16 %v697, %v693
    %v1190 = vpack.c.b16 %v702, %v698
    %v1191 = vpack.c.b16 %v703, %v699
    %v1192 = vpack.c.b16 %v704, %v700
    %v1193 = vpack.c.b16 %v705, %v701
    %v1194 = vpack.c.b16 %v710, %v706
    %v1195 = vpack.c.b16 %v711, %v707
    %v1196 = vpack.c.b16 %v712, %v708
    %v1197 = vpack.c.b16 %v713, %v709
    %v1198 = vpack.c.b16 %v718, %v714
    %v1199 = vpack.c.b16 %v719, %v715
    %v1200 = vpack.c.b16 %v720, %v716
    %v1201 = vpack.c.b16 %v721, %v717
    %v1202 = vpack.c.b16 %v726, %v722
    %v1203 = vpack.c.b16 %v727, %v723
    %v1204 = vpack.c.b16 %v728, %v724
    %v1205 = vpack.c.b16 %v729, %v725
    %v1206 = vpack.c.b16 %v734, %v730
    %v1207 = vpack.c.b16 %v735, %v731
    %v1208 = vpack.c.b16 %v736, %v732
    %v1209 = vpack.c.b16 %v737, %v733
    %v1210 = vpack.c.b16 %v742, %v738
    %v1211 = vpack.c.b16 %v743, %v739
    %v1212 = vpack.c.b16 %v744, %v740
    %v1213 = vpack.c.b16 %v745, %v741
    %v1214 = vpack.c.b16 %v750, %v746
    %v1215 = vpack.c.b16 %v751, %v747
    %v1216 = vpack.c.b16 %v752, %v748
    %v1217 = vpack.c.b16 %v753, %v749
    %v1218 = vpack.c.b16 %v758, %v754
    %v1219 = vpack.c.b16 %v759, %v755
    %v1220 = vpack.c.b16 %v760, %v756
    %v1221 = vpack.c.b16 %v761, %v757
    %v1222 = vpack.c.b16 %v766, %v762
    %v1223 = vpack.c.b16 %v767, %v763
    %v1224 = vpack.c.b16 %v768, %v764
    %v1225 = vpack.c.b16 %v769, %v765
    %v1226 = vpack.c.b16 %v774, %v770
    %v1227 = vpack.c.b16 %v775, %v771
    %v1228 = vpack.c.b16 %v776, %v772
    %v1229 = vpack.c.b16 %v777, %v773
    %v1230 = vpack.c.b16 %v782, %v778
    %v1231 = vpack.c.b16 %v783, %v779
    %v1232 = vpack.c.b16 %v784, %v780
    %v1233 = vpack.c.b16 %v785, %v781
    %v1234 = vpack.c.b16 %v790, %v786
    %v1235 = vpack.c.b16 %v791, %v787
    %v1236 = vpack.c.b16 %v792, %v788
    %v1237 = vpack.c.b16 %v793, %v789
    %v1238 = vpack.c.b16 %v798, %v794
    %v1239 = vpack.c.b16 %v799, %v795
    %v1240 = vpack.c.b16 %v800, %v796
    %v1241 = vpack.c.b16 %v801, %v797
    %v1242 = vpack.c.b16 %v806, %v802
    %v1243 = vpack.c.b16 %v807, %v803
    %v1244 = vpack.c.b16 %v808, %v804
    %v1245 = vpack.c.b16 %v809, %v805
    %v1246 = vpack.c.b16 %v814, %v810
    %v1247 = vpack.c.b16 %v815, %v811
    %v1248 = vpack.c.b16 %v816, %v812
    %v1249 = vpack.c.b16 %v817, %v813
    %v1250 = vpack.c.b16 %v822, %v818
    %v1251 = vpack.c.b16 %v823, %v819
    %v1252 = vpack.c.b16 %v824, %v820
    %v1253 = vpack.c.b16 %v825, %v821
    %v1254 = vpack.c.b16 %v830, %v826
    %v1255 = vpack.c.b16 %v831, %v827
    %v1256 = vpack.c.b16 %v832, %v828
    %v1257 = vpack.c.b16 %v833, %v829
    %v1258 = vpack.c.b16 %v838, %v834
    %v1259 = vpack.c.b16 %v839, %v835
    %v1260 = vpack.c.b16 %v840, %v836
    %v1261 = vpack.c.b16 %v841, %v837
    %v1262 = vpack.c.b16 %v846, %v842
    %v1263 = vpack.c.b16 %v847, %v843
    %v1264 = vpack.c.b16 %v848, %v844
    %v1265 = vpack.c.b16 %v849, %v845
    %v1266 = vpack.c.b16 %v854, %v850
    %v1267 = vpack.c.b16 %v855, %v851
    %v1268 = vpack.c.b16 %v856, %v852
    %v1269 = vpack.c.b16 %v857, %v853
    %v1270 = vpack.c.b16 %v862, %v858
    %v1271 = vpack.c.b16 %v863, %v859
    %v1272 = vpack.c.b16 %v864, %v860
    %v1273 = vpack.c.b16 %v865, %v861
    %v1274 = vpack.c.b16 %v870, %v866
    %v1275 = vpack.c.b16 %v871, %v867
    %v1276 = vpack.c.b16 %v872, %v868
    %v1277 = vpack.c.b16 %v873, %v869
    %v1278 = vpack.c.b16 %v878, %v874
    %v1279 = vpack.c.b16 %v879, %v875
    %v1280 = vpack.c.b16 %v880, %v876
    %v1281 = vpack.c.b16 %v881, %v877
    %v1282 = vpack.c.b16 %v886, %v882
    %v1283 = vpack.c.b16 %v887, %v883
    %v1284 = vpack.c.b16 %v888, %v884
    %v1285 = vpack.c.b16 %v889, %v885
    %v1286 = vpack.c.b16 %v894, %v890
    %v1287 = vpack.c.b16 %v895, %v891
    %v1288 = vpack.c.b16 %v896, %v892
    %v1289 = vpack.c.b16 %v897, %v893
    %v1290 = vpack.c.b16 %v902, %v898
    %v1291 = vpack.c.b16 %v903, %v899
    %v1292 = vpack.c.b16 %v904, %v900
    %v1293 = vpack.c.b16 %v905, %v901
    %v1294 = vpack.c.b16 %v910, %v906
    %v1295 = vpack.c.b16 %v911, %v907
    %v1296 = vpack.c.b16 %v912, %v908
    %v1297 = vpack.c.b16 %v913, %v909
    %v1298 = vpack.c.b16 %v918, %v914
    %v1299 = vpack.c.b16 %v919, %v915
    %v1300 = vpack.c.b16 %v920, %v916
    %v1301 = vpack.c.b16 %v921, %v917
    %v1302 = vpack.c.b16 %v926, %v922
    %v1303 = vpack.c.b16 %v927, %v923
    %v1304 = vpack.c.b16 %v928, %v924
    %v1305 = vpack.c.b16 %v929, %v925
    %v1306 = vpack.c.b16 %v934, %v930
    %v1307 = vpack.c.b16 %v935, %v931
    %v1308 = vpack.c.b16 %v936, %v932
    %v1309 = vpack.c.b16 %v937, %v933
    %v1310 = vpack.c.b16 %v942, %v938
    %v1311 = vpack.c.b16 %v943, %v939
    %v1312 = vpack.c.b16 %v944, %v940
    %v1313 = vpack.c.b16 %v945, %v941
    %v1314 = vpack.c.b16 %v950, %v946
    %v1315 = vpack.c.b16 %v951, %v947
    %v1316 = vpack.c.b16 %v952, %v948
    %v1317 = vpack.c.b16 %v953, %v949
    %v1318 = vpack.c.b16 %v958, %v954
    %v1319 = vpack.c.b16 %v959, %v955
    %v1320 = vpack.c.b16 %v960, %v956
    %v1321 = vpack.c.b16 %v961, %v957
    %v1322 = vpack.c.b16 %v966, %v962
    %v1323 = vpack.c.b16 %v967, %v963
    %v1324 = vpack.c.b16 %v968, %v964
    %v1325 = vpack.c.b16 %v969, %v965
    %v1326 = vpack.c.b16 %v974, %v970
    %v1327 = vpack.c.b16 %v975, %v971
    %v1328 = vpack.c.b16 %v976, %v972
    %v1329 = vpack.c.b16 %v977, %v973
    %v1330 = vpack.c.b16 %v982, %v978
    %v1331 = vpack.c.b16 %v983, %v979
    %v1332 = vpack.c.b16 %v984, %v980
    %v1333 = vpack.c.b16 %v985, %v981
    %v1334 = vpack.c.b16 %v990, %v986
    %v1335 = vpack.c.b16 %v991, %v987
    %v1336 = vpack.c.b16 %v992, %v988
    %v1337 = vpack.c.b16 %v993, %v989
    %v1338 = vpack.c.b16 %v998, %v994
    %v1339 = vpack.c.b16 %v999, %v995
    %v1340 = vpack.c.b16 %v1000, %v996
    %v1341 = vpack.c.b16 %v1001, %v997
    %v1342 = vpack.c.b16 %v1006, %v1002
    %v1343 = vpack.c.b16 %v1007, %v1003
    %v1344 = vpack.c.b16 %v1008, %v1004
    %v1345 = vpack.c.b16 %v1009, %v1005
    %v1346 = vpack.c.b16 %v1014, %v1010
    %v1347 = vpack.c.b16 %v1015, %v1011
    %v1348 = vpack.c.b16 %v1016, %v1012
    %v1349 = vpack.c.b16 %v1017, %v1013
    %v1350 = vpack.c.b16 %v1022, %v1018
    %v1351 = vpack.c.b16 %v1023, %v1019
    %v1352 = vpack.c.b16 %v1024, %v1020
    %v1353 = vpack.c.b16 %v1025, %v1021
    %v1354 = vpack.c.b16 %v1030, %v1026
    %v1355 = vpack.c.b16 %v1031, %v1027
    %v1356 = vpack.c.b16 %v1032, %v1028
    %v1357 = vpack.c.b16 %v1033, %v1029
    %v1358 = vpack.c.b16 %v1038, %v1034
    %v1359 = vpack.c.b16 %v1039, %v1035
    %v1360 = vpack.c.b16 %v1040, %v1036
    %v1361 = vpack.c.b16 %v1041, %v1037
    %v1362 = vpack.c.b16 %v1046, %v1042
    %v1363 = vpack.c.b16 %v1047, %v1043
    %v1364 = vpack.c.b16 %v1048, %v1044
    %v1365 = vpack.c.b16 %v1049, %v1045
    %v1366 = vpack.c.b16 %v1054, %v1050
    %v1367 = vpack.c.b16 %v1055, %v1051
    %v1368 = vpack.c.b16 %v1056, %v1052
    %v1369 = vpack.c.b16 %v1057, %v1053
    %v1370 = vpack.c.b16 %v1062, %v1058
    %v1371 = vpack.c.b16 %v1063, %v1059
    %v1372 = vpack.c.b16 %v1064, %v1060
    %v1373 = vpack.c.b16 %v1065, %v1061
    %v1374 = vpack.c.b16 %v1070, %v1066
    %v1375 = vpack.c.b16 %v1071, %v1067
    %v1376 = vpack.c.b16 %v1072, %v1068
    %v1377 = vpack.c.b16 %v1073, %v1069
    %v1378 = vpack.c.b16 %v1078, %v1074
    %v1379 = vpack.c.b16 %v1079, %v1075
    %v1380 = vpack.c.b16 %v1080, %v1076
    %v1381 = vpack.c.b16 %v1081, %v1077
    %v1382 = vpack.c.b16 %v1086, %v1082
    %v1383 = vpack.c.b16 %v1087, %v1083
    %v1384 = vpack.c.b16 %v1088, %v1084
    %v1385 = vpack.c.b16 %v1089, %v1085
    %v1386 = vpack.c.b16 %v1094, %v1090
    %v1387 = vpack.c.b16 %v1095, %v1091
    %v1388 = vpack.c.b16 %v1096, %v1092
    %v1389 = vpack.c.b16 %v1097, %v1093
    %v1390 = vpack.c.b16 %v1102, %v1098
    %v1391 = vpack.c.b16 %v1103, %v1099
    %v1392 = vpack.c.b16 %v1104, %v1100
    %v1393 = vpack.c.b16 %v1105, %v1101
    %v1394 = vpack.c.b16 %v1110, %v1106
    %v1395 = vpack.c.b16 %v1111, %v1107
    %v1396 = vpack.c.b16 %v1112, %v1108
    %v1397 = vpack.c.b16 %v1113, %v1109
    %v1398 = vpack.c.b16 %v1118, %v1114
    %v1399 = vpack.c.b16 %v1119, %v1115
    %v1400 = vpack.c.b16 %v1120, %v1116
    %v1401 = vpack.c.b16 %v1121, %v1117
    %v1402 = vpack.c.b16 %v1126, %v1122
    %v1403 = vpack.c.b16 %v1127, %v1123
    %v1404 = vpack.c.b16 %v1128, %v1124
    %v1405 = vpack.c.b16 %v1129, %v1125
    %v1406 = vpack.c.b16 %v1134, %v1130
    %v1407 = vpack.c.b16 %v1135, %v1131
    %v1408 = vpack.c.b16 %v1136, %v1132
    %v1409 = vpack.c.b16 %v1137, %v1133
    %v1410 = vpack.c.b16 %v1142, %v1138
    %v1411 = vpack.c.b16 %v1143, %v1139
    %v1412 = vpack.c.b16 %v1144, %v1140
    %v1413 = vpack.c.b16 %v1145, %v1141
    %v1414 = vpack.c.b16 %v1150, %v1146
    %v1415 = vpack.c.b16 %v1151, %v1147
    %v1416 = vpack.c.b16 %v1152, %v1148
    %v1417 = vpack.c.b16 %v1153, %v1149
    %v1418 = vpack.c.b16 %v1158, %v1154
    %v1419 = vpack.c.b16 %v1159, %v1155
    %v1420 = vpack.c.b16 %v1160, %v1156
    %v1421 = vpack.c.b16 %v1161, %v1157
    %v1422 = vpack.c.b16 %v1166, %v1162
    %v1423 = vpack.c.b16 %v1167, %v1163
    %v1424 = vpack.c.b16 %v1168, %v1164
    %v1425 = vpack.c.b16 %v1169, %v1165
    %1682 = vmatprep.subr.bf16.mxu0 %v1199
    %1683 = vmatpush1.bf16.msra.mxu0 %v1198
    %1684 = vmatprep.subr.bf16.mxu0 %v1195
    %1685 = vmatpush1.bf16.msra.mxu0 %v1194
    %1686 = vmatprep.subr.bf16.mxu0 %v1191
    %1687 = vmatpush1.bf16.msra.mxu0 %v1190
    %1688 = vmatprep.subr.bf16.mxu0 %v1187
    %1689 = vmatpush1.bf16.msra.mxu0 %v1186
    %1690 = vmatprep.subr.bf16.mxu0 %v1183
    %1691 = vmatpush1.bf16.msra.mxu0 %v1182
    %1692 = vmatprep.subr.bf16.mxu0 %v1179
    %1693 = vmatpush1.bf16.msra.mxu0 %v1178
    %1694 = vmatprep.subr.bf16.mxu0 %v1175
    %1695 = vmatpush1.bf16.msra.mxu0 %v1174
    %1696 = vmatprep.subr.bf16.mxu0 %v1171
    %1697 = vmatpush1.bf16.msra.mxu0 %v1170
    %1698 = vmatprep.subr.bf16.mxu0 %v1231
    %1699 = vmatpush2.bf16.msra.mxu0 %v1230
    %1700 = vmatprep.subr.bf16.mxu0 %v1227
    %1701 = vmatpush2.bf16.msra.mxu0 %v1226
    %1702 = vmatprep.subr.bf16.mxu0 %v1223
    %1703 = vmatpush2.bf16.msra.mxu0 %v1222
    %1704 = vmatprep.subr.bf16.mxu0 %v1219
    %1705 = vmatpush2.bf16.msra.mxu0 %v1218
    %1706 = vmatprep.subr.bf16.mxu0 %v1215
    %1707 = vmatpush2.bf16.msra.mxu0 %v1214
    %1708 = vmatprep.subr.bf16.mxu0 %v1211
    %1709 = vmatpush2.bf16.msra.mxu0 %v1210
    %1710 = vmatprep.subr.bf16.mxu0 %v1207
    %1711 = vmatpush2.bf16.msra.mxu0 %v1206
    %1712 = vmatprep.subr.bf16.mxu0 %v1203
    %1713 = vmatpush2.bf16.msra.mxu0 %v1202
    %1714 = vmatprep.mubr.bf16.mxu0 %v387
    %1715 = vmatmul.mubr.bf16.gmra.mxu0 %v386
    %v1716 = vpop.f32.mrf.mxu0
    %v1717 = vadd.f32 %v357, %v1716
    %v1718 = vpop.f32.mrf.mxu0
    %v1719 = vadd.f32 %v361, %v1718
    %v1720 = vpop.f32.mrf.mxu0
    %v1721 = vpop.f32.mrf.mxu0
    %1722 = vdwg.mxu0
    %1723 = vmatprep.subr.bf16.mxu0 %v1263
    %1724 = vmatpush1.bf16.msra.mxu0 %v1262
    %1725 = vmatprep.subr.bf16.mxu0 %v1259
    %1726 = vmatpush1.bf16.msra.mxu0 %v1258
    %1727 = vmatprep.subr.bf16.mxu0 %v1255
    %1728 = vmatpush1.bf16.msra.mxu0 %v1254
    %1729 = vmatprep.subr.bf16.mxu0 %v1251
    %1730 = vmatpush1.bf16.msra.mxu0 %v1250
    %1731 = vmatprep.subr.bf16.mxu0 %v1247
    %1732 = vmatpush1.bf16.msra.mxu0 %v1246
    %1733 = vmatprep.subr.bf16.mxu0 %v1243
    %1734 = vmatpush1.bf16.msra.mxu0 %v1242
    %1735 = vmatprep.subr.bf16.mxu0 %v1239
    %1736 = vmatpush1.bf16.msra.mxu0 %v1238
    %1737 = vmatprep.subr.bf16.mxu0 %v1235
    %1738 = vmatpush1.bf16.msra.mxu0 %v1234
    %1739 = vmatprep.subr.bf16.mxu0 %v1295
    %1740 = vmatpush2.bf16.msra.mxu0 %v1294
    %1741 = vmatprep.subr.bf16.mxu0 %v1291
    %1742 = vmatpush2.bf16.msra.mxu0 %v1290
    %1743 = vmatprep.subr.bf16.mxu0 %v1287
    %1744 = vmatpush2.bf16.msra.mxu0 %v1286
    %1745 = vmatprep.subr.bf16.mxu0 %v1283
    %1746 = vmatpush2.bf16.msra.mxu0 %v1282
    %1747 = vmatprep.subr.bf16.mxu0 %v1279
    %1748 = vmatpush2.bf16.msra.mxu0 %v1278
    %1749 = vmatprep.subr.bf16.mxu0 %v1275
    %1750 = vmatpush2.bf16.msra.mxu0 %v1274
    %1751 = vmatprep.subr.bf16.mxu0 %v1271
    %1752 = vmatpush2.bf16.msra.mxu0 %v1270
    %1753 = vmatprep.subr.bf16.mxu0 %v1267
    %1754 = vmatpush2.bf16.msra.mxu0 %v1266
    %1755 = vmatprep.mubr.bf16.mxu0 %v389
    %1756 = vmatmul.mubr.bf16.gmra.mxu0 %v388
    %v1757 = vpop.f32.mrf.mxu0
    %v1758 = vadd.f32 %v1717, %v1757
    %v1759 = vpop.f32.mrf.mxu0
    %v1760 = vadd.f32 %v1719, %v1759
    %v1761 = vpop.f32.mrf.mxu0
    %v1762 = vpop.f32.mrf.mxu0
    %1763 = vdwg.mxu0
    %1764 = vmatprep.subr.bf16.mxu0 %v1327
    %1765 = vmatpush1.bf16.msra.mxu0 %v1326
    %1766 = vmatprep.subr.bf16.mxu0 %v1323
    %1767 = vmatpush1.bf16.msra.mxu0 %v1322
    %1768 = vmatprep.subr.bf16.mxu0 %v1319
    %1769 = vmatpush1.bf16.msra.mxu0 %v1318
    %1770 = vmatprep.subr.bf16.mxu0 %v1315
    %1771 = vmatpush1.bf16.msra.mxu0 %v1314
    %1772 = vmatprep.subr.bf16.mxu0 %v1311
    %1773 = vmatpush1.bf16.msra.mxu0 %v1310
    %1774 = vmatprep.subr.bf16.mxu0 %v1307
    %1775 = vmatpush1.bf16.msra.mxu0 %v1306
    %1776 = vmatprep.subr.bf16.mxu0 %v1303
    %1777 = vmatpush1.bf16.msra.mxu0 %v1302
    %1778 = vmatprep.subr.bf16.mxu0 %v1299
    %1779 = vmatpush1.bf16.msra.mxu0 %v1298
    %1780 = vmatprep.subr.bf16.mxu0 %v1359
    %1781 = vmatpush2.bf16.msra.mxu0 %v1358
    %1782 = vmatprep.subr.bf16.mxu0 %v1355
    %1783 = vmatpush2.bf16.msra.mxu0 %v1354
    %1784 = vmatprep.subr.bf16.mxu0 %v1351
    %1785 = vmatpush2.bf16.msra.mxu0 %v1350
    %1786 = vmatprep.subr.bf16.mxu0 %v1347
    %1787 = vmatpush2.bf16.msra.mxu0 %v1346
    %1788 = vmatprep.subr.bf16.mxu0 %v1343
    %1789 = vmatpush2.bf16.msra.mxu0 %v1342
    %1790 = vmatprep.subr.bf16.mxu0 %v1339
    %1791 = vmatpush2.bf16.msra.mxu0 %v1338
    %1792 = vmatprep.subr.bf16.mxu0 %v1335
    %1793 = vmatpush2.bf16.msra.mxu0 %v1334
    %1794 = vmatprep.subr.bf16.mxu0 %v1331
    %1795 = vmatpush2.bf16.msra.mxu0 %v1330
    %1796 = vmatprep.mubr.bf16.mxu0 %v391
    %1797 = vmatmul.mubr.bf16.gmra.mxu0 %v390
    %v1798 = vpop.f32.mrf.mxu0
    %v1799 = vadd.f32 %v1758, %v1798
    %v1800 = vpop.f32.mrf.mxu0
    %v1801 = vadd.f32 %v1760, %v1800
    %v1802 = vpop.f32.mrf.mxu0
    %v1803 = vpop.f32.mrf.mxu0
    %1804 = vdwg.mxu0
    %1805 = vmatprep.subr.bf16.mxu0 %v1391
    %1806 = vmatpush1.bf16.msra.mxu0 %v1390
    %1807 = vmatprep.subr.bf16.mxu0 %v1387
    %1808 = vmatpush1.bf16.msra.mxu0 %v1386
    %1809 = vmatprep.subr.bf16.mxu0 %v1383
    %1810 = vmatpush1.bf16.msra.mxu0 %v1382
    %1811 = vmatprep.subr.bf16.mxu0 %v1379
    %1812 = vmatpush1.bf16.msra.mxu0 %v1378
    %1813 = vmatprep.subr.bf16.mxu0 %v1375
    %1814 = vmatpush1.bf16.msra.mxu0 %v1374
    %1815 = vmatprep.subr.bf16.mxu0 %v1371
    %1816 = vmatpush1.bf16.msra.mxu0 %v1370
    %1817 = vmatprep.subr.bf16.mxu0 %v1367
    %1818 = vmatpush1.bf16.msra.mxu0 %v1366
    %1819 = vmatprep.subr.bf16.mxu0 %v1363
    %1820 = vmatpush1.bf16.msra.mxu0 %v1362
    %1821 = vmatprep.subr.bf16.mxu0 %v1423
    %1822 = vmatpush2.bf16.msra.mxu0 %v1422
    %1823 = vmatprep.subr.bf16.mxu0 %v1419
    %1824 = vmatpush2.bf16.msra.mxu0 %v1418
    %1825 = vmatprep.subr.bf16.mxu0 %v1415
    %1826 = vmatpush2.bf16.msra.mxu0 %v1414
    %1827 = vmatprep.subr.bf16.mxu0 %v1411
    %1828 = vmatpush2.bf16.msra.mxu0 %v1410
    %1829 = vmatprep.subr.bf16.mxu0 %v1407
    %1830 = vmatpush2.bf16.msra.mxu0 %v1406
    %1831 = vmatprep.subr.bf16.mxu0 %v1403
    %1832 = vmatpush2.bf16.msra.mxu0 %v1402
    %1833 = vmatprep.subr.bf16.mxu0 %v1399
    %1834 = vmatpush2.bf16.msra.mxu0 %v1398
    %1835 = vmatprep.subr.bf16.mxu0 %v1395
    %1836 = vmatpush2.bf16.msra.mxu0 %v1394
    %1837 = vmatprep.mubr.bf16.mxu0 %v393
    %1838 = vmatmul.mubr.bf16.gmra.mxu0 %v392
    %v1839 = vpop.f32.mrf.mxu0
    %v1840 = vadd.f32 %v1799, %v1839
    %v1841 = vpop.f32.mrf.mxu0
    %v1842 = vadd.f32 %v1801, %v1841
    %v1843 = vpop.f32.mrf.mxu0
    %v1844 = vpop.f32.mrf.mxu0
    %1845 = vdwg.mxu0
    %1846 = vmatprep.subr.bf16.mxu0 %v1201
    %1847 = vmatpush1.bf16.msra.mxu0 %v1200
    %1848 = vmatprep.subr.bf16.mxu0 %v1197
    %1849 = vmatpush1.bf16.msra.mxu0 %v1196
    %1850 = vmatprep.subr.bf16.mxu0 %v1193
    %1851 = vmatpush1.bf16.msra.mxu0 %v1192
    %1852 = vmatprep.subr.bf16.mxu0 %v1189
    %1853 = vmatpush1.bf16.msra.mxu0 %v1188
    %1854 = vmatprep.subr.bf16.mxu0 %v1185
    %1855 = vmatpush1.bf16.msra.mxu0 %v1184
    %1856 = vmatprep.subr.bf16.mxu0 %v1181
    %1857 = vmatpush1.bf16.msra.mxu0 %v1180
    %1858 = vmatprep.subr.bf16.mxu0 %v1177
    %1859 = vmatpush1.bf16.msra.mxu0 %v1176
    %1860 = vmatprep.subr.bf16.mxu0 %v1173
    %1861 = vmatpush1.bf16.msra.mxu0 %v1172
    %1862 = vmatprep.subr.bf16.mxu0 %v1233
    %1863 = vmatpush2.bf16.msra.mxu0 %v1232
    %1864 = vmatprep.subr.bf16.mxu0 %v1229
    %1865 = vmatpush2.bf16.msra.mxu0 %v1228
    %1866 = vmatprep.subr.bf16.mxu0 %v1225
    %1867 = vmatpush2.bf16.msra.mxu0 %v1224
    %1868 = vmatprep.subr.bf16.mxu0 %v1221
    %1869 = vmatpush2.bf16.msra.mxu0 %v1220
    %1870 = vmatprep.subr.bf16.mxu0 %v1217
    %1871 = vmatpush2.bf16.msra.mxu0 %v1216
    %1872 = vmatprep.subr.bf16.mxu0 %v1213
    %1873 = vmatpush2.bf16.msra.mxu0 %v1212
    %1874 = vmatprep.subr.bf16.mxu0 %v1209
    %1875 = vmatpush2.bf16.msra.mxu0 %v1208
    %1876 = vmatprep.subr.bf16.mxu0 %v1205
    %1877 = vmatpush2.bf16.msra.mxu0 %v1204
    %1878 = vmatprep.mubr.bf16.mxu0 %v387
    %1879 = vmatmul.mubr.bf16.gmra.mxu0 %v386
    %v1880 = vpop.f32.mrf.mxu0
    %v1881 = vadd.f32 %v365, %v1880
    %v1882 = vpop.f32.mrf.mxu0
    %v1883 = vadd.f32 %v369, %v1882
    %v1884 = vpop.f32.mrf.mxu0
    %v1885 = vpop.f32.mrf.mxu0
    %1886 = vdwg.mxu0
    %1887 = vmatprep.subr.bf16.mxu0 %v1265
    %1888 = vmatpush1.bf16.msra.mxu0 %v1264
    %1889 = vmatprep.subr.bf16.mxu0 %v1261
    %1890 = vmatpush1.bf16.msra.mxu0 %v1260
    %1891 = vmatprep.subr.bf16.mxu0 %v1257
    %1892 = vmatpush1.bf16.msra.mxu0 %v1256
    %1893 = vmatprep.subr.bf16.mxu0 %v1253
    %1894 = vmatpush1.bf16.msra.mxu0 %v1252
    %1895 = vmatprep.subr.bf16.mxu0 %v1249
    %1896 = vmatpush1.bf16.msra.mxu0 %v1248
    %1897 = vmatprep.subr.bf16.mxu0 %v1245
    %1898 = vmatpush1.bf16.msra.mxu0 %v1244
    %1899 = vmatprep.subr.bf16.mxu0 %v1241
    %1900 = vmatpush1.bf16.msra.mxu0 %v1240
    %1901 = vmatprep.subr.bf16.mxu0 %v1237
    %1902 = vmatpush1.bf16.msra.mxu0 %v1236
    %1903 = vmatprep.subr.bf16.mxu0 %v1297
    %1904 = vmatpush2.bf16.msra.mxu0 %v1296
    %1905 = vmatprep.subr.bf16.mxu0 %v1293
    %1906 = vmatpush2.bf16.msra.mxu0 %v1292
    %1907 = vmatprep.subr.bf16.mxu0 %v1289
    %1908 = vmatpush2.bf16.msra.mxu0 %v1288
    %1909 = vmatprep.subr.bf16.mxu0 %v1285
    %1910 = vmatpush2.bf16.msra.mxu0 %v1284
    %1911 = vmatprep.subr.bf16.mxu0 %v1281
    %1912 = vmatpush2.bf16.msra.mxu0 %v1280
    %1913 = vmatprep.subr.bf16.mxu0 %v1277
    %1914 = vmatpush2.bf16.msra.mxu0 %v1276
    %1915 = vmatprep.subr.bf16.mxu0 %v1273
    %1916 = vmatpush2.bf16.msra.mxu0 %v1272
    %1917 = vmatprep.subr.bf16.mxu0 %v1269
    %1918 = vmatpush2.bf16.msra.mxu0 %v1268
    %1919 = vmatprep.mubr.bf16.mxu0 %v389
    %1920 = vmatmul.mubr.bf16.gmra.mxu0 %v388
    %v1921 = vpop.f32.mrf.mxu0
    %v1922 = vadd.f32 %v1881, %v1921
    %v1923 = vpop.f32.mrf.mxu0
    %v1924 = vadd.f32 %v1883, %v1923
    %v1925 = vpop.f32.mrf.mxu0
    %v1926 = vpop.f32.mrf.mxu0
    %1927 = vdwg.mxu0
    %1928 = vmatprep.subr.bf16.mxu0 %v1329
    %1929 = vmatpush1.bf16.msra.mxu0 %v1328
    %1930 = vmatprep.subr.bf16.mxu0 %v1325
    %1931 = vmatpush1.bf16.msra.mxu0 %v1324
    %1932 = vmatprep.subr.bf16.mxu0 %v1321
    %1933 = vmatpush1.bf16.msra.mxu0 %v1320
    %1934 = vmatprep.subr.bf16.mxu0 %v1317
    %1935 = vmatpush1.bf16.msra.mxu0 %v1316
    %1936 = vmatprep.subr.bf16.mxu0 %v1313
    %1937 = vmatpush1.bf16.msra.mxu0 %v1312
    %1938 = vmatprep.subr.bf16.mxu0 %v1309
    %1939 = vmatpush1.bf16.msra.mxu0 %v1308
    %1940 = vmatprep.subr.bf16.mxu0 %v1305
    %1941 = vmatpush1.bf16.msra.mxu0 %v1304
    %1942 = vmatprep.subr.bf16.mxu0 %v1301
    %1943 = vmatpush1.bf16.msra.mxu0 %v1300
    %1944 = vmatprep.subr.bf16.mxu0 %v1361
    %1945 = vmatpush2.bf16.msra.mxu0 %v1360
    %1946 = vmatprep.subr.bf16.mxu0 %v1357
    %1947 = vmatpush2.bf16.msra.mxu0 %v1356
    %1948 = vmatprep.subr.bf16.mxu0 %v1353
    %1949 = vmatpush2.bf16.msra.mxu0 %v1352
    %1950 = vmatprep.subr.bf16.mxu0 %v1349
    %1951 = vmatpush2.bf16.msra.mxu0 %v1348
    %1952 = vmatprep.subr.bf16.mxu0 %v1345
    %1953 = vmatpush2.bf16.msra.mxu0 %v1344
    %1954 = vmatprep.subr.bf16.mxu0 %v1341
    %1955 = vmatpush2.bf16.msra.mxu0 %v1340
    %1956 = vmatprep.subr.bf16.mxu0 %v1337
    %1957 = vmatpush2.bf16.msra.mxu0 %v1336
    %1958 = vmatprep.subr.bf16.mxu0 %v1333
    %1959 = vmatpush2.bf16.msra.mxu0 %v1332
    %1960 = vmatprep.mubr.bf16.mxu0 %v391
    %1961 = vmatmul.mubr.bf16.gmra.mxu0 %v390
    %v1962 = vpop.f32.mrf.mxu0
    %v1963 = vadd.f32 %v1922, %v1962
    %v1964 = vpop.f32.mrf.mxu0
    %v1965 = vadd.f32 %v1924, %v1964
    %v1966 = vpop.f32.mrf.mxu0
    %v1967 = vpop.f32.mrf.mxu0
    %1968 = vdwg.mxu0
    %1969 = vmatprep.subr.bf16.mxu0 %v1393
    %1970 = vmatpush1.bf16.msra.mxu0 %v1392
    %1971 = vmatprep.subr.bf16.mxu0 %v1389
    %1972 = vmatpush1.bf16.msra.mxu0 %v1388
    %1973 = vmatprep.subr.bf16.mxu0 %v1385
    %1974 = vmatpush1.bf16.msra.mxu0 %v1384
    %1975 = vmatprep.subr.bf16.mxu0 %v1381
    %1976 = vmatpush1.bf16.msra.mxu0 %v1380
    %1977 = vmatprep.subr.bf16.mxu0 %v1377
    %1978 = vmatpush1.bf16.msra.mxu0 %v1376
    %1979 = vmatprep.subr.bf16.mxu0 %v1373
    %1980 = vmatpush1.bf16.msra.mxu0 %v1372
    %1981 = vmatprep.subr.bf16.mxu0 %v1369
    %1982 = vmatpush1.bf16.msra.mxu0 %v1368
    %1983 = vmatprep.subr.bf16.mxu0 %v1365
    %1984 = vmatpush1.bf16.msra.mxu0 %v1364
    %1985 = vmatprep.subr.bf16.mxu0 %v1425
    %1986 = vmatpush2.bf16.msra.mxu0 %v1424
    %1987 = vmatprep.subr.bf16.mxu0 %v1421
    %1988 = vmatpush2.bf16.msra.mxu0 %v1420
    %1989 = vmatprep.subr.bf16.mxu0 %v1417
    %1990 = vmatpush2.bf16.msra.mxu0 %v1416
    %1991 = vmatprep.subr.bf16.mxu0 %v1413
    %1992 = vmatpush2.bf16.msra.mxu0 %v1412
    %1993 = vmatprep.subr.bf16.mxu0 %v1409
    %1994 = vmatpush2.bf16.msra.mxu0 %v1408
    %1995 = vmatprep.subr.bf16.mxu0 %v1405
    %1996 = vmatpush2.bf16.msra.mxu0 %v1404
    %1997 = vmatprep.subr.bf16.mxu0 %v1401
    %1998 = vmatpush2.bf16.msra.mxu0 %v1400
    %1999 = vmatprep.subr.bf16.mxu0 %v1397
    %2000 = vmatpush2.bf16.msra.mxu0 %v1396
    %2001 = vmatprep.mubr.bf16.mxu0 %v393
    %2002 = vmatmul.mubr.bf16.gmra.mxu0 %v392
    %v2003 = vpop.f32.mrf.mxu0
    %v2004 = vadd.f32 %v1963, %v2003
    %v2005 = vpop.f32.mrf.mxu0
    %v2006 = vadd.f32 %v1965, %v2005
    %v2007 = vpop.f32.mrf.mxu0
    %v2008 = vpop.f32.mrf.mxu0
    %2009 = vdwg.mxu0
    %v2010 = vmax.f32 %v1840, 0.0
    %v2011 = vmax.f32 %v1842, 0.0
    %v2012 = vmax.f32 %v2004, 0.0
    %v2013 = vmax.f32 %v2006, 0.0
    %v2014 = vpack.c.bf16 %v2010, %v2010
    %v2015 = vpack.c.bf16 %v2011, %v2011
    %v2016 = vpack.c.bf16 %v2012, %v2012
    %v2017 = vpack.c.bf16 %v2013, %v2013
    %v2018 = vld [vmem:[#allocation8] sm:$0xff]
    %v2019 = vld [vmem:[#allocation8 + $0x8] sm:$0xff]
    %v2020 = vld [vmem:[#allocation8 + $0x10] sm:$0xff]
    %v2021 = vld [vmem:[#allocation8 + $0x18] sm:$0xff]
    %v2022 = vld [vmem:[#allocation8 + $0x20] sm:$0xff]
    %v2023 = vld [vmem:[#allocation8 + $0x28] sm:$0xff]
    %v2024 = vld [vmem:[#allocation8 + $0x30] sm:$0xff]
    %v2025 = vld [vmem:[#allocation8 + $0x38] sm:$0xff]
    %v2026 = vld [vmem:[#allocation8 + $0x40] sm:$0xff]
    %v2027 = vld [vmem:[#allocation8 + $0x48] sm:$0xff]
    %v2028 = vld [vmem:[#allocation8 + $0x50] sm:$0xff]
    %v2029 = vld [vmem:[#allocation8 + $0x58] sm:$0xff]
    %v2030 = vld [vmem:[#allocation8 + $0x60] sm:$0xff]
    %v2031 = vld [vmem:[#allocation8 + $0x68] sm:$0xff]
    %v2032 = vld [vmem:[#allocation8 + $0x70] sm:$0xff]
    %v2033 = vld [vmem:[#allocation8 + $0x78] sm:$0xff]
    %v2034 = vld [vmem:[#allocation8 + $0x80] sm:$0xff]
    %v2035 = vld [vmem:[#allocation8 + $0x88] sm:$0xff]
    %v2036 = vld [vmem:[#allocation8 + $0x90] sm:$0xff]
    %v2037 = vld [vmem:[#allocation8 + $0x98] sm:$0xff]
    %v2038 = vld [vmem:[#allocation8 + $0xa0] sm:$0xff]
    %v2039 = vld [vmem:[#allocation8 + $0xa8] sm:$0xff]
    %v2040 = vld [vmem:[#allocation8 + $0xb0] sm:$0xff]
    %v2041 = vld [vmem:[#allocation8 + $0xb8] sm:$0xff]
    %v2042 = vld [vmem:[#allocation8 + $0xc0] sm:$0xff]
    %v2043 = vld [vmem:[#allocation8 + $0xc8] sm:$0xff]
    %v2044 = vld [vmem:[#allocation8 + $0xd0] sm:$0xff]
    %v2045 = vld [vmem:[#allocation8 + $0xd8] sm:$0xff]
    %v2046 = vld [vmem:[#allocation8 + $0xe0] sm:$0xff]
    %v2047 = vld [vmem:[#allocation8 + $0xe8] sm:$0xff]
    %v2048 = vld [vmem:[#allocation8 + $0xf0] sm:$0xff]
    %v2049 = vld [vmem:[#allocation8 + $0xf8] sm:$0xff]
    %v2050 = vld [vmem:[#allocation8 + $0x100] sm:$0xff]
    %v2051 = vld [vmem:[#allocation8 + $0x108] sm:$0xff]
    %v2052 = vld [vmem:[#allocation8 + $0x110] sm:$0xff]
    %v2053 = vld [vmem:[#allocation8 + $0x118] sm:$0xff]
    %v2054 = vld [vmem:[#allocation8 + $0x120] sm:$0xff]
    %v2055 = vld [vmem:[#allocation8 + $0x128] sm:$0xff]
    %v2056 = vld [vmem:[#allocation8 + $0x130] sm:$0xff]
    %v2057 = vld [vmem:[#allocation8 + $0x138] sm:$0xff]
    %v2058 = vld [vmem:[#allocation8 + $0x140] sm:$0xff]
    %v2059 = vld [vmem:[#allocation8 + $0x148] sm:$0xff]
    %v2060 = vld [vmem:[#allocation8 + $0x150] sm:$0xff]
    %v2061 = vld [vmem:[#allocation8 + $0x158] sm:$0xff]
    %v2062 = vld [vmem:[#allocation8 + $0x160] sm:$0xff]
    %v2063 = vld [vmem:[#allocation8 + $0x168] sm:$0xff]
    %v2064 = vld [vmem:[#allocation8 + $0x170] sm:$0xff]
    %v2065 = vld [vmem:[#allocation8 + $0x178] sm:$0xff]
    %v2066 = vld [vmem:[#allocation8 + $0x180] sm:$0xff]
    %v2067 = vld [vmem:[#allocation8 + $0x188] sm:$0xff]
    %v2068 = vld [vmem:[#allocation8 + $0x190] sm:$0xff]
    %v2069 = vld [vmem:[#allocation8 + $0x198] sm:$0xff]
    %v2070 = vld [vmem:[#allocation8 + $0x1a0] sm:$0xff]
    %v2071 = vld [vmem:[#allocation8 + $0x1a8] sm:$0xff]
    %v2072 = vld [vmem:[#allocation8 + $0x1b0] sm:$0xff]
    %v2073 = vld [vmem:[#allocation8 + $0x1b8] sm:$0xff]
    %v2074 = vld [vmem:[#allocation8 + $0x1c0] sm:$0xff]
    %v2075 = vld [vmem:[#allocation8 + $0x1c8] sm:$0xff]
    %v2076 = vld [vmem:[#allocation8 + $0x1d0] sm:$0xff]
    %v2077 = vld [vmem:[#allocation8 + $0x1d8] sm:$0xff]
    %v2078 = vld [vmem:[#allocation8 + $0x1e0] sm:$0xff]
    %v2079 = vld [vmem:[#allocation8 + $0x1e8] sm:$0xff]
    %v2080 = vld [vmem:[#allocation8 + $0x1f0] sm:$0xff]
    %v2081 = vld [vmem:[#allocation8 + $0x1f8] sm:$0xff]
    %v2082 = vld [vmem:[#allocation8 + $0x200] sm:$0xff]
    %v2083 = vld [vmem:[#allocation8 + $0x208] sm:$0xff]
    %v2084 = vld [vmem:[#allocation8 + $0x210] sm:$0xff]
    %v2085 = vld [vmem:[#allocation8 + $0x218] sm:$0xff]
    %v2086 = vld [vmem:[#allocation8 + $0x220] sm:$0xff]
    %v2087 = vld [vmem:[#allocation8 + $0x228] sm:$0xff]
    %v2088 = vld [vmem:[#allocation8 + $0x230] sm:$0xff]
    %v2089 = vld [vmem:[#allocation8 + $0x238] sm:$0xff]
    %v2090 = vld [vmem:[#allocation8 + $0x240] sm:$0xff]
    %v2091 = vld [vmem:[#allocation8 + $0x248] sm:$0xff]
    %v2092 = vld [vmem:[#allocation8 + $0x250] sm:$0xff]
    %v2093 = vld [vmem:[#allocation8 + $0x258] sm:$0xff]
    %v2094 = vld [vmem:[#allocation8 + $0x260] sm:$0xff]
    %v2095 = vld [vmem:[#allocation8 + $0x268] sm:$0xff]
    %v2096 = vld [vmem:[#allocation8 + $0x270] sm:$0xff]
    %v2097 = vld [vmem:[#allocation8 + $0x278] sm:$0xff]
    %v2098 = vld [vmem:[#allocation8 + $0x280] sm:$0xff]
    %v2099 = vld [vmem:[#allocation8 + $0x288] sm:$0xff]
    %v2100 = vld [vmem:[#allocation8 + $0x290] sm:$0xff]
    %v2101 = vld [vmem:[#allocation8 + $0x298] sm:$0xff]
    %v2102 = vld [vmem:[#allocation8 + $0x2a0] sm:$0xff]
    %v2103 = vld [vmem:[#allocation8 + $0x2a8] sm:$0xff]
    %v2104 = vld [vmem:[#allocation8 + $0x2b0] sm:$0xff]
    %v2105 = vld [vmem:[#allocation8 + $0x2b8] sm:$0xff]
    %v2106 = vld [vmem:[#allocation8 + $0x2c0] sm:$0xff]
    %v2107 = vld [vmem:[#allocation8 + $0x2c8] sm:$0xff]
    %v2108 = vld [vmem:[#allocation8 + $0x2d0] sm:$0xff]
    %v2109 = vld [vmem:[#allocation8 + $0x2d8] sm:$0xff]
    %v2110 = vld [vmem:[#allocation8 + $0x2e0] sm:$0xff]
    %v2111 = vld [vmem:[#allocation8 + $0x2e8] sm:$0xff]
    %v2112 = vld [vmem:[#allocation8 + $0x2f0] sm:$0xff]
    %v2113 = vld [vmem:[#allocation8 + $0x2f8] sm:$0xff]
    %v2114 = vld [vmem:[#allocation8 + $0x300] sm:$0xff]
    %v2115 = vld [vmem:[#allocation8 + $0x308] sm:$0xff]
    %v2116 = vld [vmem:[#allocation8 + $0x310] sm:$0xff]
    %v2117 = vld [vmem:[#allocation8 + $0x318] sm:$0xff]
    %v2118 = vld [vmem:[#allocation8 + $0x320] sm:$0xff]
    %v2119 = vld [vmem:[#allocation8 + $0x328] sm:$0xff]
    %v2120 = vld [vmem:[#allocation8 + $0x330] sm:$0xff]
    %v2121 = vld [vmem:[#allocation8 + $0x338] sm:$0xff]
    %v2122 = vld [vmem:[#allocation8 + $0x340] sm:$0xff]
    %v2123 = vld [vmem:[#allocation8 + $0x348] sm:$0xff]
    %v2124 = vld [vmem:[#allocation8 + $0x350] sm:$0xff]
    %v2125 = vld [vmem:[#allocation8 + $0x358] sm:$0xff]
    %v2126 = vld [vmem:[#allocation8 + $0x360] sm:$0xff]
    %v2127 = vld [vmem:[#allocation8 + $0x368] sm:$0xff]
    %v2128 = vld [vmem:[#allocation8 + $0x370] sm:$0xff]
    %v2129 = vld [vmem:[#allocation8 + $0x378] sm:$0xff]
    %v2130 = vld [vmem:[#allocation8 + $0x380] sm:$0xff]
    %v2131 = vld [vmem:[#allocation8 + $0x388] sm:$0xff]
    %v2132 = vld [vmem:[#allocation8 + $0x390] sm:$0xff]
    %v2133 = vld [vmem:[#allocation8 + $0x398] sm:$0xff]
    %v2134 = vld [vmem:[#allocation8 + $0x3a0] sm:$0xff]
    %v2135 = vld [vmem:[#allocation8 + $0x3a8] sm:$0xff]
    %v2136 = vld [vmem:[#allocation8 + $0x3b0] sm:$0xff]
    %v2137 = vld [vmem:[#allocation8 + $0x3b8] sm:$0xff]
    %v2138 = vld [vmem:[#allocation8 + $0x3c0] sm:$0xff]
    %v2139 = vld [vmem:[#allocation8 + $0x3c8] sm:$0xff]
    %v2140 = vld [vmem:[#allocation8 + $0x3d0] sm:$0xff]
    %v2141 = vld [vmem:[#allocation8 + $0x3d8] sm:$0xff]
    %v2142 = vld [vmem:[#allocation8 + $0x3e0] sm:$0xff]
    %v2143 = vld [vmem:[#allocation8 + $0x3e8] sm:$0xff]
    %v2144 = vld [vmem:[#allocation8 + $0x3f0] sm:$0xff]
    %v2145 = vld [vmem:[#allocation8 + $0x3f8] sm:$0xff]
    %v2146 = vld [vmem:[%s4] sm:$0xf]
    %v2148 = vlaneseq
    %v2149 = vshrl.u32 %v2148, 7
    %v2150 = vsub.s32 0, %v2149
    %v2151 = vrot.slane %v2146, %v2150
    %v2152 = vlaneseq
    %v2153 = vshrl.u32 %v2152, 7
    %v2154 = vsub.s32 1, %v2153
    %v2155 = vrot.slane %v2146, %v2154
    %v2156 = vlaneseq
    %v2157 = vshrl.u32 %v2156, 7
    %v2158 = vsub.s32 2, %v2157
    %v2159 = vrot.slane %v2146, %v2158
    %v2160 = vlaneseq
    %v2161 = vshrl.u32 %v2160, 7
    %v2162 = vsub.s32 3, %v2161
    %v2163 = vrot.slane %v2146, %v2162
    %v2296 = vunpack.c.l.b16 %v2018
    %v2297 = vunpack.c.h.b16 %v2018
    %v2298 = vunpack.c.l.b16 %v2019
    %v2299 = vunpack.c.h.b16 %v2019
    %v2300 = vunpack.c.l.b16 %v2020
    %v2301 = vunpack.c.h.b16 %v2020
    %v2302 = vunpack.c.l.b16 %v2021
    %v2303 = vunpack.c.h.b16 %v2021
    %v2304 = vunpack.c.l.b16 %v2022
    %v2305 = vunpack.c.h.b16 %v2022
    %v2306 = vunpack.c.l.b16 %v2023
    %v2307 = vunpack.c.h.b16 %v2023
    %v2308 = vunpack.c.l.b16 %v2024
    %v2309 = vunpack.c.h.b16 %v2024
    %v2310 = vunpack.c.l.b16 %v2025
    %v2311 = vunpack.c.h.b16 %v2025
    %v2312 = vunpack.c.l.b16 %v2026
    %v2313 = vunpack.c.h.b16 %v2026
    %v2314 = vunpack.c.l.b16 %v2027
    %v2315 = vunpack.c.h.b16 %v2027
    %v2316 = vunpack.c.l.b16 %v2028
    %v2317 = vunpack.c.h.b16 %v2028
    %v2318 = vunpack.c.l.b16 %v2029
    %v2319 = vunpack.c.h.b16 %v2029
    %v2320 = vunpack.c.l.b16 %v2030
    %v2321 = vunpack.c.h.b16 %v2030
    %v2322 = vunpack.c.l.b16 %v2031
    %v2323 = vunpack.c.h.b16 %v2031
    %v2324 = vunpack.c.l.b16 %v2032
    %v2325 = vunpack.c.h.b16 %v2032
    %v2326 = vunpack.c.l.b16 %v2033
    %v2327 = vunpack.c.h.b16 %v2033
    %v2328 = vunpack.c.l.b16 %v2034
    %v2329 = vunpack.c.h.b16 %v2034
    %v2330 = vunpack.c.l.b16 %v2035
    %v2331 = vunpack.c.h.b16 %v2035
    %v2332 = vunpack.c.l.b16 %v2036
    %v2333 = vunpack.c.h.b16 %v2036
    %v2334 = vunpack.c.l.b16 %v2037
    %v2335 = vunpack.c.h.b16 %v2037
    %v2336 = vunpack.c.l.b16 %v2038
    %v2337 = vunpack.c.h.b16 %v2038
    %v2338 = vunpack.c.l.b16 %v2039
    %v2339 = vunpack.c.h.b16 %v2039
    %v2340 = vunpack.c.l.b16 %v2040
    %v2341 = vunpack.c.h.b16 %v2040
    %v2342 = vunpack.c.l.b16 %v2041
    %v2343 = vunpack.c.h.b16 %v2041
    %v2344 = vunpack.c.l.b16 %v2042
    %v2345 = vunpack.c.h.b16 %v2042
    %v2346 = vunpack.c.l.b16 %v2043
    %v2347 = vunpack.c.h.b16 %v2043
    %v2348 = vunpack.c.l.b16 %v2044
    %v2349 = vunpack.c.h.b16 %v2044
    %v2350 = vunpack.c.l.b16 %v2045
    %v2351 = vunpack.c.h.b16 %v2045
    %v2352 = vunpack.c.l.b16 %v2046
    %v2353 = vunpack.c.h.b16 %v2046
    %v2354 = vunpack.c.l.b16 %v2047
    %v2355 = vunpack.c.h.b16 %v2047
    %v2356 = vunpack.c.l.b16 %v2048
    %v2357 = vunpack.c.h.b16 %v2048
    %v2358 = vunpack.c.l.b16 %v2049
    %v2359 = vunpack.c.h.b16 %v2049
    %v2360 = vunpack.c.l.b16 %v2050
    %v2361 = vunpack.c.h.b16 %v2050
    %v2362 = vunpack.c.l.b16 %v2051
    %v2363 = vunpack.c.h.b16 %v2051
    %v2364 = vunpack.c.l.b16 %v2052
    %v2365 = vunpack.c.h.b16 %v2052
    %v2366 = vunpack.c.l.b16 %v2053
    %v2367 = vunpack.c.h.b16 %v2053
    %v2368 = vunpack.c.l.b16 %v2054
    %v2369 = vunpack.c.h.b16 %v2054
    %v2370 = vunpack.c.l.b16 %v2055
    %v2371 = vunpack.c.h.b16 %v2055
    %v2372 = vunpack.c.l.b16 %v2056
    %v2373 = vunpack.c.h.b16 %v2056
    %v2374 = vunpack.c.l.b16 %v2057
    %v2375 = vunpack.c.h.b16 %v2057
    %v2376 = vunpack.c.l.b16 %v2058
    %v2377 = vunpack.c.h.b16 %v2058
    %v2378 = vunpack.c.l.b16 %v2059
    %v2379 = vunpack.c.h.b16 %v2059
    %v2380 = vunpack.c.l.b16 %v2060
    %v2381 = vunpack.c.h.b16 %v2060
    %v2382 = vunpack.c.l.b16 %v2061
    %v2383 = vunpack.c.h.b16 %v2061
    %v2384 = vunpack.c.l.b16 %v2062
    %v2385 = vunpack.c.h.b16 %v2062
    %v2386 = vunpack.c.l.b16 %v2063
    %v2387 = vunpack.c.h.b16 %v2063
    %v2388 = vunpack.c.l.b16 %v2064
    %v2389 = vunpack.c.h.b16 %v2064
    %v2390 = vunpack.c.l.b16 %v2065
    %v2391 = vunpack.c.h.b16 %v2065
    %v2392 = vunpack.c.l.b16 %v2066
    %v2393 = vunpack.c.h.b16 %v2066
    %v2394 = vunpack.c.l.b16 %v2067
    %v2395 = vunpack.c.h.b16 %v2067
    %v2396 = vunpack.c.l.b16 %v2068
    %v2397 = vunpack.c.h.b16 %v2068
    %v2398 = vunpack.c.l.b16 %v2069
    %v2399 = vunpack.c.h.b16 %v2069
    %v2400 = vunpack.c.l.b16 %v2070
    %v2401 = vunpack.c.h.b16 %v2070
    %v2402 = vunpack.c.l.b16 %v2071
    %v2403 = vunpack.c.h.b16 %v2071
    %v2404 = vunpack.c.l.b16 %v2072
    %v2405 = vunpack.c.h.b16 %v2072
    %v2406 = vunpack.c.l.b16 %v2073
    %v2407 = vunpack.c.h.b16 %v2073
    %v2408 = vunpack.c.l.b16 %v2074
    %v2409 = vunpack.c.h.b16 %v2074
    %v2410 = vunpack.c.l.b16 %v2075
    %v2411 = vunpack.c.h.b16 %v2075
    %v2412 = vunpack.c.l.b16 %v2076
    %v2413 = vunpack.c.h.b16 %v2076
    %v2414 = vunpack.c.l.b16 %v2077
    %v2415 = vunpack.c.h.b16 %v2077
    %v2416 = vunpack.c.l.b16 %v2078
    %v2417 = vunpack.c.h.b16 %v2078
    %v2418 = vunpack.c.l.b16 %v2079
    %v2419 = vunpack.c.h.b16 %v2079
    %v2420 = vunpack.c.l.b16 %v2080
    %v2421 = vunpack.c.h.b16 %v2080
    %v2422 = vunpack.c.l.b16 %v2081
    %v2423 = vunpack.c.h.b16 %v2081
    %v2424 = vunpack.c.l.b16 %v2082
    %v2425 = vunpack.c.h.b16 %v2082
    %v2426 = vunpack.c.l.b16 %v2083
    %v2427 = vunpack.c.h.b16 %v2083
    %v2428 = vunpack.c.l.b16 %v2084
    %v2429 = vunpack.c.h.b16 %v2084
    %v2430 = vunpack.c.l.b16 %v2085
    %v2431 = vunpack.c.h.b16 %v2085
    %v2432 = vunpack.c.l.b16 %v2086
    %v2433 = vunpack.c.h.b16 %v2086
    %v2434 = vunpack.c.l.b16 %v2087
    %v2435 = vunpack.c.h.b16 %v2087
    %v2436 = vunpack.c.l.b16 %v2088
    %v2437 = vunpack.c.h.b16 %v2088
    %v2438 = vunpack.c.l.b16 %v2089
    %v2439 = vunpack.c.h.b16 %v2089
    %v2440 = vunpack.c.l.b16 %v2090
    %v2441 = vunpack.c.h.b16 %v2090
    %v2442 = vunpack.c.l.b16 %v2091
    %v2443 = vunpack.c.h.b16 %v2091
    %v2444 = vunpack.c.l.b16 %v2092
    %v2445 = vunpack.c.h.b16 %v2092
    %v2446 = vunpack.c.l.b16 %v2093
    %v2447 = vunpack.c.h.b16 %v2093
    %v2448 = vunpack.c.l.b16 %v2094
    %v2449 = vunpack.c.h.b16 %v2094
    %v2450 = vunpack.c.l.b16 %v2095
    %v2451 = vunpack.c.h.b16 %v2095
    %v2452 = vunpack.c.l.b16 %v2096
    %v2453 = vunpack.c.h.b16 %v2096
    %v2454 = vunpack.c.l.b16 %v2097
    %v2455 = vunpack.c.h.b16 %v2097
    %v2456 = vunpack.c.l.b16 %v2098
    %v2457 = vunpack.c.h.b16 %v2098
    %v2458 = vunpack.c.l.b16 %v2099
    %v2459 = vunpack.c.h.b16 %v2099
    %v2460 = vunpack.c.l.b16 %v2100
    %v2461 = vunpack.c.h.b16 %v2100
    %v2462 = vunpack.c.l.b16 %v2101
    %v2463 = vunpack.c.h.b16 %v2101
    %v2464 = vunpack.c.l.b16 %v2102
    %v2465 = vunpack.c.h.b16 %v2102
    %v2466 = vunpack.c.l.b16 %v2103
    %v2467 = vunpack.c.h.b16 %v2103
    %v2468 = vunpack.c.l.b16 %v2104
    %v2469 = vunpack.c.h.b16 %v2104
    %v2470 = vunpack.c.l.b16 %v2105
    %v2471 = vunpack.c.h.b16 %v2105
    %v2472 = vunpack.c.l.b16 %v2106
    %v2473 = vunpack.c.h.b16 %v2106
    %v2474 = vunpack.c.l.b16 %v2107
    %v2475 = vunpack.c.h.b16 %v2107
    %v2476 = vunpack.c.l.b16 %v2108
    %v2477 = vunpack.c.h.b16 %v2108
    %v2478 = vunpack.c.l.b16 %v2109
    %v2479 = vunpack.c.h.b16 %v2109
    %v2480 = vunpack.c.l.b16 %v2110
    %v2481 = vunpack.c.h.b16 %v2110
    %v2482 = vunpack.c.l.b16 %v2111
    %v2483 = vunpack.c.h.b16 %v2111
    %v2484 = vunpack.c.l.b16 %v2112
    %v2485 = vunpack.c.h.b16 %v2112
    %v2486 = vunpack.c.l.b16 %v2113
    %v2487 = vunpack.c.h.b16 %v2113
    %v2488 = vunpack.c.l.b16 %v2114
    %v2489 = vunpack.c.h.b16 %v2114
    %v2490 = vunpack.c.l.b16 %v2115
    %v2491 = vunpack.c.h.b16 %v2115
    %v2492 = vunpack.c.l.b16 %v2116
    %v2493 = vunpack.c.h.b16 %v2116
    %v2494 = vunpack.c.l.b16 %v2117
    %v2495 = vunpack.c.h.b16 %v2117
    %v2496 = vunpack.c.l.b16 %v2118
    %v2497 = vunpack.c.h.b16 %v2118
    %v2498 = vunpack.c.l.b16 %v2119
    %v2499 = vunpack.c.h.b16 %v2119
    %v2500 = vunpack.c.l.b16 %v2120
    %v2501 = vunpack.c.h.b16 %v2120
    %v2502 = vunpack.c.l.b16 %v2121
    %v2503 = vunpack.c.h.b16 %v2121
    %v2504 = vunpack.c.l.b16 %v2122
    %v2505 = vunpack.c.h.b16 %v2122
    %v2506 = vunpack.c.l.b16 %v2123
    %v2507 = vunpack.c.h.b16 %v2123
    %v2508 = vunpack.c.l.b16 %v2124
    %v2509 = vunpack.c.h.b16 %v2124
    %v2510 = vunpack.c.l.b16 %v2125
    %v2511 = vunpack.c.h.b16 %v2125
    %v2512 = vunpack.c.l.b16 %v2126
    %v2513 = vunpack.c.h.b16 %v2126
    %v2514 = vunpack.c.l.b16 %v2127
    %v2515 = vunpack.c.h.b16 %v2127
    %v2516 = vunpack.c.l.b16 %v2128
    %v2517 = vunpack.c.h.b16 %v2128
    %v2518 = vunpack.c.l.b16 %v2129
    %v2519 = vunpack.c.h.b16 %v2129
    %v2520 = vunpack.c.l.b16 %v2130
    %v2521 = vunpack.c.h.b16 %v2130
    %v2522 = vunpack.c.l.b16 %v2131
    %v2523 = vunpack.c.h.b16 %v2131
    %v2524 = vunpack.c.l.b16 %v2132
    %v2525 = vunpack.c.h.b16 %v2132
    %v2526 = vunpack.c.l.b16 %v2133
    %v2527 = vunpack.c.h.b16 %v2133
    %v2528 = vunpack.c.l.b16 %v2134
    %v2529 = vunpack.c.h.b16 %v2134
    %v2530 = vunpack.c.l.b16 %v2135
    %v2531 = vunpack.c.h.b16 %v2135
    %v2532 = vunpack.c.l.b16 %v2136
    %v2533 = vunpack.c.h.b16 %v2136
    %v2534 = vunpack.c.l.b16 %v2137
    %v2535 = vunpack.c.h.b16 %v2137
    %v2536 = vunpack.c.l.b16 %v2138
    %v2537 = vunpack.c.h.b16 %v2138
    %v2538 = vunpack.c.l.b16 %v2139
    %v2539 = vunpack.c.h.b16 %v2139
    %v2540 = vunpack.c.l.b16 %v2140
    %v2541 = vunpack.c.h.b16 %v2140
    %v2542 = vunpack.c.l.b16 %v2141
    %v2543 = vunpack.c.h.b16 %v2141
    %v2544 = vunpack.c.l.b16 %v2142
    %v2545 = vunpack.c.h.b16 %v2142
    %v2546 = vunpack.c.l.b16 %v2143
    %v2547 = vunpack.c.h.b16 %v2143
    %v2548 = vunpack.c.l.b16 %v2144
    %v2549 = vunpack.c.h.b16 %v2144
    %v2550 = vunpack.c.l.b16 %v2145
    %v2551 = vunpack.c.h.b16 %v2145
    %v2552 = vpack.c.b16 %v2300, %v2296
    %v2553 = vpack.c.b16 %v2301, %v2297
    %v2554 = vpack.c.b16 %v2302, %v2298
    %v2555 = vpack.c.b16 %v2303, %v2299
    %v2556 = vpack.c.b16 %v2308, %v2304
    %v2557 = vpack.c.b16 %v2309, %v2305
    %v2558 = vpack.c.b16 %v2310, %v2306
    %v2559 = vpack.c.b16 %v2311, %v2307
    %v2560 = vpack.c.b16 %v2316, %v2312
    %v2561 = vpack.c.b16 %v2317, %v2313
    %v2562 = vpack.c.b16 %v2318, %v2314
    %v2563 = vpack.c.b16 %v2319, %v2315
    %v2564 = vpack.c.b16 %v2324, %v2320
    %v2565 = vpack.c.b16 %v2325, %v2321
    %v2566 = vpack.c.b16 %v2326, %v2322
    %v2567 = vpack.c.b16 %v2327, %v2323
    %v2568 = vpack.c.b16 %v2332, %v2328
    %v2569 = vpack.c.b16 %v2333, %v2329
    %v2570 = vpack.c.b16 %v2334, %v2330
    %v2571 = vpack.c.b16 %v2335, %v2331
    %v2572 = vpack.c.b16 %v2340, %v2336
    %v2573 = vpack.c.b16 %v2341, %v2337
    %v2574 = vpack.c.b16 %v2342, %v2338
    %v2575 = vpack.c.b16 %v2343, %v2339
    %v2576 = vpack.c.b16 %v2348, %v2344
    %v2577 = vpack.c.b16 %v2349, %v2345
    %v2578 = vpack.c.b16 %v2350, %v2346
    %v2579 = vpack.c.b16 %v2351, %v2347
    %v2580 = vpack.c.b16 %v2356, %v2352
    %v2581 = vpack.c.b16 %v2357, %v2353
    %v2582 = vpack.c.b16 %v2358, %v2354
    %v2583 = vpack.c.b16 %v2359, %v2355
    %v2584 = vpack.c.b16 %v2364, %v2360
    %v2585 = vpack.c.b16 %v2365, %v2361
    %v2586 = vpack.c.b16 %v2366, %v2362
    %v2587 = vpack.c.b16 %v2367, %v2363
    %v2588 = vpack.c.b16 %v2372, %v2368
    %v2589 = vpack.c.b16 %v2373, %v2369
    %v2590 = vpack.c.b16 %v2374, %v2370
    %v2591 = vpack.c.b16 %v2375, %v2371
    %v2592 = vpack.c.b16 %v2380, %v2376
    %v2593 = vpack.c.b16 %v2381, %v2377
    %v2594 = vpack.c.b16 %v2382, %v2378
    %v2595 = vpack.c.b16 %v2383, %v2379
    %v2596 = vpack.c.b16 %v2388, %v2384
    %v2597 = vpack.c.b16 %v2389, %v2385
    %v2598 = vpack.c.b16 %v2390, %v2386
    %v2599 = vpack.c.b16 %v2391, %v2387
    %v2600 = vpack.c.b16 %v2396, %v2392
    %v2601 = vpack.c.b16 %v2397, %v2393
    %v2602 = vpack.c.b16 %v2398, %v2394
    %v2603 = vpack.c.b16 %v2399, %v2395
    %v2604 = vpack.c.b16 %v2404, %v2400
    %v2605 = vpack.c.b16 %v2405, %v2401
    %v2606 = vpack.c.b16 %v2406, %v2402
    %v2607 = vpack.c.b16 %v2407, %v2403
    %v2608 = vpack.c.b16 %v2412, %v2408
    %v2609 = vpack.c.b16 %v2413, %v2409
    %v2610 = vpack.c.b16 %v2414, %v2410
    %v2611 = vpack.c.b16 %v2415, %v2411
    %v2612 = vpack.c.b16 %v2420, %v2416
    %v2613 = vpack.c.b16 %v2421, %v2417
    %v2614 = vpack.c.b16 %v2422, %v2418
    %v2615 = vpack.c.b16 %v2423, %v2419
    %v2616 = vpack.c.b16 %v2428, %v2424
    %v2617 = vpack.c.b16 %v2429, %v2425
    %v2618 = vpack.c.b16 %v2430, %v2426
    %v2619 = vpack.c.b16 %v2431, %v2427
    %v2620 = vpack.c.b16 %v2436, %v2432
    %v2621 = vpack.c.b16 %v2437, %v2433
    %v2622 = vpack.c.b16 %v2438, %v2434
    %v2623 = vpack.c.b16 %v2439, %v2435
    %v2624 = vpack.c.b16 %v2444, %v2440
    %v2625 = vpack.c.b16 %v2445, %v2441
    %v2626 = vpack.c.b16 %v2446, %v2442
    %v2627 = vpack.c.b16 %v2447, %v2443
    %v2628 = vpack.c.b16 %v2452, %v2448
    %v2629 = vpack.c.b16 %v2453, %v2449
    %v2630 = vpack.c.b16 %v2454, %v2450
    %v2631 = vpack.c.b16 %v2455, %v2451
    %v2632 = vpack.c.b16 %v2460, %v2456
    %v2633 = vpack.c.b16 %v2461, %v2457
    %v2634 = vpack.c.b16 %v2462, %v2458
    %v2635 = vpack.c.b16 %v2463, %v2459
    %v2636 = vpack.c.b16 %v2468, %v2464
    %v2637 = vpack.c.b16 %v2469, %v2465
    %v2638 = vpack.c.b16 %v2470, %v2466
    %v2639 = vpack.c.b16 %v2471, %v2467
    %v2640 = vpack.c.b16 %v2476, %v2472
    %v2641 = vpack.c.b16 %v2477, %v2473
    %v2642 = vpack.c.b16 %v2478, %v2474
    %v2643 = vpack.c.b16 %v2479, %v2475
    %v2644 = vpack.c.b16 %v2484, %v2480
    %v2645 = vpack.c.b16 %v2485, %v2481
    %v2646 = vpack.c.b16 %v2486, %v2482
    %v2647 = vpack.c.b16 %v2487, %v2483
    %v2648 = vpack.c.b16 %v2492, %v2488
    %v2649 = vpack.c.b16 %v2493, %v2489
    %v2650 = vpack.c.b16 %v2494, %v2490
    %v2651 = vpack.c.b16 %v2495, %v2491
    %v2652 = vpack.c.b16 %v2500, %v2496
    %v2653 = vpack.c.b16 %v2501, %v2497
    %v2654 = vpack.c.b16 %v2502, %v2498
    %v2655 = vpack.c.b16 %v2503, %v2499
    %v2656 = vpack.c.b16 %v2508, %v2504
    %v2657 = vpack.c.b16 %v2509, %v2505
    %v2658 = vpack.c.b16 %v2510, %v2506
    %v2659 = vpack.c.b16 %v2511, %v2507
    %v2660 = vpack.c.b16 %v2516, %v2512
    %v2661 = vpack.c.b16 %v2517, %v2513
    %v2662 = vpack.c.b16 %v2518, %v2514
    %v2663 = vpack.c.b16 %v2519, %v2515
    %v2664 = vpack.c.b16 %v2524, %v2520
    %v2665 = vpack.c.b16 %v2525, %v2521
    %v2666 = vpack.c.b16 %v2526, %v2522
    %v2667 = vpack.c.b16 %v2527, %v2523
    %v2668 = vpack.c.b16 %v2532, %v2528
    %v2669 = vpack.c.b16 %v2533, %v2529
    %v2670 = vpack.c.b16 %v2534, %v2530
    %v2671 = vpack.c.b16 %v2535, %v2531
    %v2672 = vpack.c.b16 %v2540, %v2536
    %v2673 = vpack.c.b16 %v2541, %v2537
    %v2674 = vpack.c.b16 %v2542, %v2538
    %v2675 = vpack.c.b16 %v2543, %v2539
    %v2676 = vpack.c.b16 %v2548, %v2544
    %v2677 = vpack.c.b16 %v2549, %v2545
    %v2678 = vpack.c.b16 %v2550, %v2546
    %v2679 = vpack.c.b16 %v2551, %v2547
    %2808 = vmatprep.subr.bf16.mxu0 %v2581
    %2809 = vmatpush1.bf16.msra.mxu0 %v2580
    %2810 = vmatprep.subr.bf16.mxu0 %v2577
    %2811 = vmatpush1.bf16.msra.mxu0 %v2576
    %2812 = vmatprep.subr.bf16.mxu0 %v2573
    %2813 = vmatpush1.bf16.msra.mxu0 %v2572
    %2814 = vmatprep.subr.bf16.mxu0 %v2569
    %2815 = vmatpush1.bf16.msra.mxu0 %v2568
    %2816 = vmatprep.subr.bf16.mxu0 %v2565
    %2817 = vmatpush1.bf16.msra.mxu0 %v2564
    %2818 = vmatprep.subr.bf16.mxu0 %v2561
    %2819 = vmatpush1.bf16.msra.mxu0 %v2560
    %2820 = vmatprep.subr.bf16.mxu0 %v2557
    %2821 = vmatpush1.bf16.msra.mxu0 %v2556
    %2822 = vmatprep.subr.bf16.mxu0 %v2553
    %2823 = vmatpush1.bf16.msra.mxu0 %v2552
    %2824 = vmatprep.subr.bf16.mxu0 %v2613
    %2825 = vmatpush2.bf16.msra.mxu0 %v2612
    %2826 = vmatprep.subr.bf16.mxu0 %v2609
    %2827 = vmatpush2.bf16.msra.mxu0 %v2608
    %2828 = vmatprep.subr.bf16.mxu0 %v2605
    %2829 = vmatpush2.bf16.msra.mxu0 %v2604
    %2830 = vmatprep.subr.bf16.mxu0 %v2601
    %2831 = vmatpush2.bf16.msra.mxu0 %v2600
    %2832 = vmatprep.subr.bf16.mxu0 %v2597
    %2833 = vmatpush2.bf16.msra.mxu0 %v2596
    %2834 = vmatprep.subr.bf16.mxu0 %v2593
    %2835 = vmatpush2.bf16.msra.mxu0 %v2592
    %2836 = vmatprep.subr.bf16.mxu0 %v2589
    %2837 = vmatpush2.bf16.msra.mxu0 %v2588
    %2838 = vmatprep.subr.bf16.mxu0 %v2585
    %2839 = vmatpush2.bf16.msra.mxu0 %v2584
    %2840 = vmatprep.mubr.bf16.mxu0 %v2015
    %2841 = vmatmul.mubr.bf16.gmra.mxu0 %v2014
    %v2842 = vpop.f32.mrf.mxu0
    %v2843 = vadd.f32 %v2151, %v2842
    %v2844 = vpop.f32.mrf.mxu0
    %v2845 = vadd.f32 %v2155, %v2844
    %v2846 = vpop.f32.mrf.mxu0
    %v2847 = vpop.f32.mrf.mxu0
    %2848 = vdwg.mxu0
    %2849 = vmatprep.subr.bf16.mxu0 %v2645
    %2850 = vmatpush1.bf16.msra.mxu0 %v2644
    %2851 = vmatprep.subr.bf16.mxu0 %v2641
    %2852 = vmatpush1.bf16.msra.mxu0 %v2640
    %2853 = vmatprep.subr.bf16.mxu0 %v2637
    %2854 = vmatpush1.bf16.msra.mxu0 %v2636
    %2855 = vmatprep.subr.bf16.mxu0 %v2633
    %2856 = vmatpush1.bf16.msra.mxu0 %v2632
    %2857 = vmatprep.subr.bf16.mxu0 %v2629
    %2858 = vmatpush1.bf16.msra.mxu0 %v2628
    %2859 = vmatprep.subr.bf16.mxu0 %v2625
    %2860 = vmatpush1.bf16.msra.mxu0 %v2624
    %2861 = vmatprep.subr.bf16.mxu0 %v2621
    %2862 = vmatpush1.bf16.msra.mxu0 %v2620
    %2863 = vmatprep.subr.bf16.mxu0 %v2617
    %2864 = vmatpush1.bf16.msra.mxu0 %v2616
    %2865 = vmatprep.subr.bf16.mxu0 %v2677
    %2866 = vmatpush2.bf16.msra.mxu0 %v2676
    %2867 = vmatprep.subr.bf16.mxu0 %v2673
    %2868 = vmatpush2.bf16.msra.mxu0 %v2672
    %2869 = vmatprep.subr.bf16.mxu0 %v2669
    %2870 = vmatpush2.bf16.msra.mxu0 %v2668
    %2871 = vmatprep.subr.bf16.mxu0 %v2665
    %2872 = vmatpush2.bf16.msra.mxu0 %v2664
    %2873 = vmatprep.subr.bf16.mxu0 %v2661
    %2874 = vmatpush2.bf16.msra.mxu0 %v2660
    %2875 = vmatprep.subr.bf16.mxu0 %v2657
    %2876 = vmatpush2.bf16.msra.mxu0 %v2656
    %2877 = vmatprep.subr.bf16.mxu0 %v2653
    %2878 = vmatpush2.bf16.msra.mxu0 %v2652
    %2879 = vmatprep.subr.bf16.mxu0 %v2649
    %2880 = vmatpush2.bf16.msra.mxu0 %v2648
    %2881 = vmatprep.mubr.bf16.mxu0 %v2017
    %2882 = vmatmul.mubr.bf16.gmra.mxu0 %v2016
    %v2883 = vpop.f32.mrf.mxu0
    %v2884 = vadd.f32 %v2843, %v2883
    %v2885 = vpop.f32.mrf.mxu0
    %v2886 = vadd.f32 %v2845, %v2885
    %v2887 = vpop.f32.mrf.mxu0
    %v2888 = vpop.f32.mrf.mxu0
    %2889 = vdwg.mxu0
    %2890 = vmatprep.subr.bf16.mxu0 %v2583
    %2891 = vmatpush1.bf16.msra.mxu0 %v2582
    %2892 = vmatprep.subr.bf16.mxu0 %v2579
    %2893 = vmatpush1.bf16.msra.mxu0 %v2578
    %2894 = vmatprep.subr.bf16.mxu0 %v2575
    %2895 = vmatpush1.bf16.msra.mxu0 %v2574
    %2896 = vmatprep.subr.bf16.mxu0 %v2571
    %2897 = vmatpush1.bf16.msra.mxu0 %v2570
    %2898 = vmatprep.subr.bf16.mxu0 %v2567
    %2899 = vmatpush1.bf16.msra.mxu0 %v2566
    %2900 = vmatprep.subr.bf16.mxu0 %v2563
    %2901 = vmatpush1.bf16.msra.mxu0 %v2562
    %2902 = vmatprep.subr.bf16.mxu0 %v2559
    %2903 = vmatpush1.bf16.msra.mxu0 %v2558
    %2904 = vmatprep.subr.bf16.mxu0 %v2555
    %2905 = vmatpush1.bf16.msra.mxu0 %v2554
    %2906 = vmatprep.subr.bf16.mxu0 %v2615
    %2907 = vmatpush2.bf16.msra.mxu0 %v2614
    %2908 = vmatprep.subr.bf16.mxu0 %v2611
    %2909 = vmatpush2.bf16.msra.mxu0 %v2610
    %2910 = vmatprep.subr.bf16.mxu0 %v2607
    %2911 = vmatpush2.bf16.msra.mxu0 %v2606
    %2912 = vmatprep.subr.bf16.mxu0 %v2603
    %2913 = vmatpush2.bf16.msra.mxu0 %v2602
    %2914 = vmatprep.subr.bf16.mxu0 %v2599
    %2915 = vmatpush2.bf16.msra.mxu0 %v2598
    %2916 = vmatprep.subr.bf16.mxu0 %v2595
    %2917 = vmatpush2.bf16.msra.mxu0 %v2594
    %2918 = vmatprep.subr.bf16.mxu0 %v2591
    %2919 = vmatpush2.bf16.msra.mxu0 %v2590
    %2920 = vmatprep.subr.bf16.mxu0 %v2587
    %2921 = vmatpush2.bf16.msra.mxu0 %v2586
    %2922 = vmatprep.mubr.bf16.mxu0 %v2015
    %2923 = vmatmul.mubr.bf16.gmra.mxu0 %v2014
    %v2924 = vpop.f32.mrf.mxu0
    %v2925 = vadd.f32 %v2159, %v2924
    %v2926 = vpop.f32.mrf.mxu0
    %v2927 = vadd.f32 %v2163, %v2926
    %v2928 = vpop.f32.mrf.mxu0
    %v2929 = vpop.f32.mrf.mxu0
    %2930 = vdwg.mxu0
    %2931 = vmatprep.subr.bf16.mxu0 %v2647
    %2932 = vmatpush1.bf16.msra.mxu0 %v2646
    %2933 = vmatprep.subr.bf16.mxu0 %v2643
    %2934 = vmatpush1.bf16.msra.mxu0 %v2642
    %2935 = vmatprep.subr.bf16.mxu0 %v2639
    %2936 = vmatpush1.bf16.msra.mxu0 %v2638
    %2937 = vmatprep.subr.bf16.mxu0 %v2635
    %2938 = vmatpush1.bf16.msra.mxu0 %v2634
    %2939 = vmatprep.subr.bf16.mxu0 %v2631
    %2940 = vmatpush1.bf16.msra.mxu0 %v2630
    %2941 = vmatprep.subr.bf16.mxu0 %v2627
    %2942 = vmatpush1.bf16.msra.mxu0 %v2626
    %2943 = vmatprep.subr.bf16.mxu0 %v2623
    %2944 = vmatpush1.bf16.msra.mxu0 %v2622
    %2945 = vmatprep.subr.bf16.mxu0 %v2619
    %2946 = vmatpush1.bf16.msra.mxu0 %v2618
    %2947 = vmatprep.subr.bf16.mxu0 %v2679
    %2948 = vmatpush2.bf16.msra.mxu0 %v2678
    %2949 = vmatprep.subr.bf16.mxu0 %v2675
    %2950 = vmatpush2.bf16.msra.mxu0 %v2674
    %2951 = vmatprep.subr.bf16.mxu0 %v2671
    %2952 = vmatpush2.bf16.msra.mxu0 %v2670
    %2953 = vmatprep.subr.bf16.mxu0 %v2667
    %2954 = vmatpush2.bf16.msra.mxu0 %v2666
    %2955 = vmatprep.subr.bf16.mxu0 %v2663
    %2956 = vmatpush2.bf16.msra.mxu0 %v2662
    %2957 = vmatprep.subr.bf16.mxu0 %v2659
    %2958 = vmatpush2.bf16.msra.mxu0 %v2658
    %2959 = vmatprep.subr.bf16.mxu0 %v2655
    %2960 = vmatpush2.bf16.msra.mxu0 %v2654
    %2961 = vmatprep.subr.bf16.mxu0 %v2651
    %2962 = vmatpush2.bf16.msra.mxu0 %v2650
    %2963 = vmatprep.mubr.bf16.mxu0 %v2017
    %2964 = vmatmul.mubr.bf16.gmra.mxu0 %v2016
    %v2965 = vpop.f32.mrf.mxu0
    %v2966 = vadd.f32 %v2925, %v2965
    %v2967 = vpop.f32.mrf.mxu0
    %v2968 = vadd.f32 %v2927, %v2967
    %v2969 = vpop.f32.mrf.mxu0
    %v2970 = vpop.f32.mrf.mxu0
    %2971 = vdwg.mxu0
    %v2972 = vmax.f32 %v2884, 0.0
    %v2973 = vmax.f32 %v2886, 0.0
    %v2974 = vmax.f32 %v2966, 0.0
    %v2975 = vmax.f32 %v2968, 0.0
    %v2976 = vpack.c.bf16 %v2972, %v2972
    %v2977 = vpack.c.bf16 %v2973, %v2973
    %v2978 = vpack.c.bf16 %v2974, %v2974
    %v2979 = vpack.c.bf16 %v2975, %v2975
    %v2980 = vld [vmem:[#allocation10] sm:$0xf]
    %v2981 = vld [vmem:[#allocation10 + $0x4] sm:$0xf]
    %v2982 = vld [vmem:[#allocation10 + $0x8] sm:$0xf]
    %v2983 = vld [vmem:[#allocation10 + $0xc] sm:$0xf]
    %v2984 = vld [vmem:[#allocation10 + $0x10] sm:$0xf]
    %v2985 = vld [vmem:[#allocation10 + $0x14] sm:$0xf]
    %v2986 = vld [vmem:[#allocation10 + $0x18] sm:$0xf]
    %v2987 = vld [vmem:[#allocation10 + $0x1c] sm:$0xf]
    %v2988 = vld [vmem:[#allocation10 + $0x20] sm:$0xf]
    %v2989 = vld [vmem:[#allocation10 + $0x24] sm:$0xf]
    %v2990 = vld [vmem:[#allocation10 + $0x28] sm:$0xf]
    %v2991 = vld [vmem:[#allocation10 + $0x2c] sm:$0xf]
    %v2992 = vld [vmem:[#allocation10 + $0x30] sm:$0xf]
    %v2993 = vld [vmem:[#allocation10 + $0x34] sm:$0xf]
    %v2994 = vld [vmem:[#allocation10 + $0x38] sm:$0xf]
    %v2995 = vld [vmem:[#allocation10 + $0x3c] sm:$0xf]
    %v2996 = vld [vmem:[#allocation10 + $0x40] sm:$0xf]
    %v2997 = vld [vmem:[#allocation10 + $0x44] sm:$0xf]
    %v2998 = vld [vmem:[#allocation10 + $0x48] sm:$0xf]
    %v2999 = vld [vmem:[#allocation10 + $0x4c] sm:$0xf]
    %v3000 = vld [vmem:[#allocation10 + $0x50] sm:$0xf]
    %v3001 = vld [vmem:[#allocation10 + $0x54] sm:$0xf]
    %v3002 = vld [vmem:[#allocation10 + $0x58] sm:$0xf]
    %v3003 = vld [vmem:[#allocation10 + $0x5c] sm:$0xf]
    %v3004 = vld [vmem:[#allocation10 + $0x60] sm:$0xf]
    %v3005 = vld [vmem:[#allocation10 + $0x64] sm:$0xf]
    %v3006 = vld [vmem:[#allocation10 + $0x68] sm:$0xf]
    %v3007 = vld [vmem:[#allocation10 + $0x6c] sm:$0xf]
    %v3008 = vld [vmem:[#allocation10 + $0x70] sm:$0xf]
    %v3009 = vld [vmem:[#allocation10 + $0x74] sm:$0xf]
    %v3010 = vld [vmem:[#allocation10 + $0x78] sm:$0xf]
    %v3011 = vld [vmem:[#allocation10 + $0x7c] sm:$0xf]
    %v3012 = vld [vmem:[#allocation10 + $0x80] sm:$0xf]
    %v3013 = vld [vmem:[#allocation10 + $0x84] sm:$0xf]
    %v3014 = vld [vmem:[#allocation10 + $0x88] sm:$0xf]
    %v3015 = vld [vmem:[#allocation10 + $0x8c] sm:$0xf]
    %v3016 = vld [vmem:[#allocation10 + $0x90] sm:$0xf]
    %v3017 = vld [vmem:[#allocation10 + $0x94] sm:$0xf]
    %v3018 = vld [vmem:[#allocation10 + $0x98] sm:$0xf]
    %v3019 = vld [vmem:[#allocation10 + $0x9c] sm:$0xf]
    %v3020 = vld [vmem:[#allocation10 + $0xa0] sm:$0xf]
    %v3021 = vld [vmem:[#allocation10 + $0xa4] sm:$0xf]
    %v3022 = vld [vmem:[#allocation10 + $0xa8] sm:$0xf]
    %v3023 = vld [vmem:[#allocation10 + $0xac] sm:$0xf]
    %v3024 = vld [vmem:[#allocation10 + $0xb0] sm:$0xf]
    %v3025 = vld [vmem:[#allocation10 + $0xb4] sm:$0xf]
    %v3026 = vld [vmem:[#allocation10 + $0xb8] sm:$0xf]
    %v3027 = vld [vmem:[#allocation10 + $0xbc] sm:$0xf]
    %v3028 = vld [vmem:[#allocation10 + $0xc0] sm:$0xf]
    %v3029 = vld [vmem:[#allocation10 + $0xc4] sm:$0xf]
    %v3030 = vld [vmem:[#allocation10 + $0xc8] sm:$0xf]
    %v3031 = vld [vmem:[#allocation10 + $0xcc] sm:$0xf]
    %v3032 = vld [vmem:[#allocation10 + $0xd0] sm:$0xf]
    %v3033 = vld [vmem:[#allocation10 + $0xd4] sm:$0xf]
    %v3034 = vld [vmem:[#allocation10 + $0xd8] sm:$0xf]
    %v3035 = vld [vmem:[#allocation10 + $0xdc] sm:$0xf]
    %v3036 = vld [vmem:[#allocation10 + $0xe0] sm:$0xf]
    %v3037 = vld [vmem:[#allocation10 + $0xe4] sm:$0xf]
    %v3038 = vld [vmem:[#allocation10 + $0xe8] sm:$0xf]
    %v3039 = vld [vmem:[#allocation10 + $0xec] sm:$0xf]
    %v3040 = vld [vmem:[#allocation10 + $0xf0] sm:$0xf]
    %v3041 = vld [vmem:[#allocation10 + $0xf4] sm:$0xf]
    %v3042 = vld [vmem:[#allocation10 + $0xf8] sm:$0xf]
    %v3043 = vld [vmem:[#allocation10 + $0xfc] sm:$0xf]
    %v3044 = vld [vmem:[%s6] sm:$0x1]
    %v3046 = vlaneseq
    %v3047 = vshrl.u32 %v3046, 7
    %v3048 = vsub.s32 0, %v3047
    %v3049 = vrot.slane %v3044, %v3048
    %v3115 = vunpack.c.l.b16 %v2980
    %v3116 = vunpack.c.l.b16 %v2981
    %v3117 = vunpack.c.l.b16 %v2982
    %v3118 = vunpack.c.l.b16 %v2983
    %v3119 = vunpack.c.l.b16 %v2984
    %v3120 = vunpack.c.l.b16 %v2985
    %v3121 = vunpack.c.l.b16 %v2986
    %v3122 = vunpack.c.l.b16 %v2987
    %v3123 = vunpack.c.l.b16 %v2988
    %v3124 = vunpack.c.l.b16 %v2989
    %v3125 = vunpack.c.l.b16 %v2990
    %v3126 = vunpack.c.l.b16 %v2991
    %v3127 = vunpack.c.l.b16 %v2992
    %v3128 = vunpack.c.l.b16 %v2993
    %v3129 = vunpack.c.l.b16 %v2994
    %v3130 = vunpack.c.l.b16 %v2995
    %v3131 = vunpack.c.l.b16 %v2996
    %v3132 = vunpack.c.l.b16 %v2997
    %v3133 = vunpack.c.l.b16 %v2998
    %v3134 = vunpack.c.l.b16 %v2999
    %v3135 = vunpack.c.l.b16 %v3000
    %v3136 = vunpack.c.l.b16 %v3001
    %v3137 = vunpack.c.l.b16 %v3002
    %v3138 = vunpack.c.l.b16 %v3003
    %v3139 = vunpack.c.l.b16 %v3004
    %v3140 = vunpack.c.l.b16 %v3005
    %v3141 = vunpack.c.l.b16 %v3006
    %v3142 = vunpack.c.l.b16 %v3007
    %v3143 = vunpack.c.l.b16 %v3008
    %v3144 = vunpack.c.l.b16 %v3009
    %v3145 = vunpack.c.l.b16 %v3010
    %v3146 = vunpack.c.l.b16 %v3011
    %v3147 = vunpack.c.l.b16 %v3012
    %v3148 = vunpack.c.l.b16 %v3013
    %v3149 = vunpack.c.l.b16 %v3014
    %v3150 = vunpack.c.l.b16 %v3015
    %v3151 = vunpack.c.l.b16 %v3016
    %v3152 = vunpack.c.l.b16 %v3017
    %v3153 = vunpack.c.l.b16 %v3018
    %v3154 = vunpack.c.l.b16 %v3019
    %v3155 = vunpack.c.l.b16 %v3020
    %v3156 = vunpack.c.l.b16 %v3021
    %v3157 = vunpack.c.l.b16 %v3022
    %v3158 = vunpack.c.l.b16 %v3023
    %v3159 = vunpack.c.l.b16 %v3024
    %v3160 = vunpack.c.l.b16 %v3025
    %v3161 = vunpack.c.l.b16 %v3026
    %v3162 = vunpack.c.l.b16 %v3027
    %v3163 = vunpack.c.l.b16 %v3028
    %v3164 = vunpack.c.l.b16 %v3029
    %v3165 = vunpack.c.l.b16 %v3030
    %v3166 = vunpack.c.l.b16 %v3031
    %v3167 = vunpack.c.l.b16 %v3032
    %v3168 = vunpack.c.l.b16 %v3033
    %v3169 = vunpack.c.l.b16 %v3034
    %v3170 = vunpack.c.l.b16 %v3035
    %v3171 = vunpack.c.l.b16 %v3036
    %v3172 = vunpack.c.l.b16 %v3037
    %v3173 = vunpack.c.l.b16 %v3038
    %v3174 = vunpack.c.l.b16 %v3039
    %v3175 = vunpack.c.l.b16 %v3040
    %v3176 = vunpack.c.l.b16 %v3041
    %v3177 = vunpack.c.l.b16 %v3042
    %v3178 = vunpack.c.l.b16 %v3043
    %v3179 = vpack.c.b16 %v3116, %v3115
    %v3180 = vpack.c.b16 %v3118, %v3117
    %v3181 = vpack.c.b16 %v3120, %v3119
    %v3182 = vpack.c.b16 %v3122, %v3121
    %v3183 = vpack.c.b16 %v3124, %v3123
    %v3184 = vpack.c.b16 %v3126, %v3125
    %v3185 = vpack.c.b16 %v3128, %v3127
    %v3186 = vpack.c.b16 %v3130, %v3129
    %v3187 = vpack.c.b16 %v3132, %v3131
    %v3188 = vpack.c.b16 %v3134, %v3133
    %v3189 = vpack.c.b16 %v3136, %v3135
    %v3190 = vpack.c.b16 %v3138, %v3137
    %v3191 = vpack.c.b16 %v3140, %v3139
    %v3192 = vpack.c.b16 %v3142, %v3141
    %v3193 = vpack.c.b16 %v3144, %v3143
    %v3194 = vpack.c.b16 %v3146, %v3145
    %v3195 = vpack.c.b16 %v3148, %v3147
    %v3196 = vpack.c.b16 %v3150, %v3149
    %v3197 = vpack.c.b16 %v3152, %v3151
    %v3198 = vpack.c.b16 %v3154, %v3153
    %v3199 = vpack.c.b16 %v3156, %v3155
    %v3200 = vpack.c.b16 %v3158, %v3157
    %v3201 = vpack.c.b16 %v3160, %v3159
    %v3202 = vpack.c.b16 %v3162, %v3161
    %v3203 = vpack.c.b16 %v3164, %v3163
    %v3204 = vpack.c.b16 %v3166, %v3165
    %v3205 = vpack.c.b16 %v3168, %v3167
    %v3206 = vpack.c.b16 %v3170, %v3169
    %v3207 = vpack.c.b16 %v3172, %v3171
    %v3208 = vpack.c.b16 %v3174, %v3173
    %v3209 = vpack.c.b16 %v3176, %v3175
    %v3210 = vpack.c.b16 %v3178, %v3177
    %3243 = vmatprep.subr.bf16.mxu0 0
    %3244 = vmatpush1.bf16.msra.mxu0 %v3186
    %3245 = vmatprep.subr.bf16.mxu0 0
    %3246 = vmatpush1.bf16.msra.mxu0 %v3185
    %3247 = vmatprep.subr.bf16.mxu0 0
    %3248 = vmatpush1.bf16.msra.mxu0 %v3184
    %3249 = vmatprep.subr.bf16.mxu0 0
    %3250 = vmatpush1.bf16.msra.mxu0 %v3183
    %3251 = vmatprep.subr.bf16.mxu0 0
    %3252 = vmatpush1.bf16.msra.mxu0 %v3182
    %3253 = vmatprep.subr.bf16.mxu0 0
    %3254 = vmatpush1.bf16.msra.mxu0 %v3181
    %3255 = vmatprep.subr.bf16.mxu0 0
    %3256 = vmatpush1.bf16.msra.mxu0 %v3180
    %3257 = vmatprep.subr.bf16.mxu0 0
    %3258 = vmatpush1.bf16.msra.mxu0 %v3179
    %3259 = vmatprep.subr.bf16.mxu0 0
    %3260 = vmatpush2.bf16.msra.mxu0 %v3194
    %3261 = vmatprep.subr.bf16.mxu0 0
    %3262 = vmatpush2.bf16.msra.mxu0 %v3193
    %3263 = vmatprep.subr.bf16.mxu0 0
    %3264 = vmatpush2.bf16.msra.mxu0 %v3192
    %3265 = vmatprep.subr.bf16.mxu0 0
    %3266 = vmatpush2.bf16.msra.mxu0 %v3191
    %3267 = vmatprep.subr.bf16.mxu0 0
    %3268 = vmatpush2.bf16.msra.mxu0 %v3190
    %3269 = vmatprep.subr.bf16.mxu0 0
    %3270 = vmatpush2.bf16.msra.mxu0 %v3189
    %3271 = vmatprep.subr.bf16.mxu0 0
    %3272 = vmatpush2.bf16.msra.mxu0 %v3188
    %3273 = vmatprep.subr.bf16.mxu0 0
    %3274 = vmatpush2.bf16.msra.mxu0 %v3187
    %3275 = vmatprep.mubr.bf16.mxu0 %v2977
    %3276 = vmatmul.mubr.bf16.gmra.mxu0 %v2976
    %v3277 = vpop.f32.mrf.mxu0
    %v3278 = vadd.f32 %v3049, %v3277
    %v3279 = vpop.f32.mrf.mxu0
    %v3280 = vpop.f32.mrf.mxu0
    %v3281 = vpop.f32.mrf.mxu0
    %3282 = vdwg.mxu0
    %3283 = vmatprep.subr.bf16.mxu0 0
    %3284 = vmatpush1.bf16.msra.mxu0 %v3202
    %3285 = vmatprep.subr.bf16.mxu0 0
    %3286 = vmatpush1.bf16.msra.mxu0 %v3201
    %3287 = vmatprep.subr.bf16.mxu0 0
    %3288 = vmatpush1.bf16.msra.mxu0 %v3200
    %3289 = vmatprep.subr.bf16.mxu0 0
    %3290 = vmatpush1.bf16.msra.mxu0 %v3199
    %3291 = vmatprep.subr.bf16.mxu0 0
    %3292 = vmatpush1.bf16.msra.mxu0 %v3198
    %3293 = vmatprep.subr.bf16.mxu0 0
    %3294 = vmatpush1.bf16.msra.mxu0 %v3197
    %3295 = vmatprep.subr.bf16.mxu0 0
    %3296 = vmatpush1.bf16.msra.mxu0 %v3196
    %3297 = vmatprep.subr.bf16.mxu0 0
    %3298 = vmatpush1.bf16.msra.mxu0 %v3195
    %3299 = vmatprep.subr.bf16.mxu0 0
    %3300 = vmatpush2.bf16.msra.mxu0 %v3210
    %3301 = vmatprep.subr.bf16.mxu0 0
    %3302 = vmatpush2.bf16.msra.mxu0 %v3209
    %3303 = vmatprep.subr.bf16.mxu0 0
    %3304 = vmatpush2.bf16.msra.mxu0 %v3208
    %3305 = vmatprep.subr.bf16.mxu0 0
    %3306 = vmatpush2.bf16.msra.mxu0 %v3207
    %3307 = vmatprep.subr.bf16.mxu0 0
    %3308 = vmatpush2.bf16.msra.mxu0 %v3206
    %3309 = vmatprep.subr.bf16.mxu0 0
    %3310 = vmatpush2.bf16.msra.mxu0 %v3205
    %3311 = vmatprep.subr.bf16.mxu0 0
    %3312 = vmatpush2.bf16.msra.mxu0 %v3204
    %3313 = vmatprep.subr.bf16.mxu0 0
    %3314 = vmatpush2.bf16.msra.mxu0 %v3203
    %3315 = vmatprep.mubr.bf16.mxu0 %v2979
    %3316 = vmatmul.mubr.bf16.gmra.mxu0 %v2978
    %v3317 = vpop.f32.mrf.mxu0
    %v3318 = vadd.f32 %v3278, %v3317
    %v3319 = vpop.f32.mrf.mxu0
    %v3320 = vpop.f32.mrf.mxu0
    %v3321 = vpop.f32.mrf.mxu0
    %3322 = vdwg.mxu0
    %3323 = vst [vmem:[#allocation11] sm:$0xff] %v3318
    // Predicated region
    $region50: #{tpu_custom_call.1} parent=1 // pred_check
      _
    $region51: #{tpu_custom_call.1} parent=1 // pred_check_branch
      %3325 = sbr.rel (0) target = $region53
    $region52: #{tpu_custom_call.1} parent=1 // pred_region
      %s3327 = ssub.s32 128, 128
      %3328 = vsyncadd [#allocation4], %s3327
      %s3330 = sshll.u32 [#allocation11], 4
      %s3331 = int_to_ptr.vmem [resolvable:$true] %s3330
      %3333 = dma.vmem_to_hbm [thread:$0]  %s3331, 128, %s7, [#allocation4]
    $region53: #{tpu_custom_call.1} parent=1 // pred_fallthru
      _
    // Predicated region
    $region54: #{tpu_custom_call.1} parent=1 // pred_check
      _
    $region55: #{tpu_custom_call.1} parent=1 // pred_check_branch
      %3335 = sbr.rel (0) target = $region57
    $region56: #{tpu_custom_call.1} parent=1 // pred_region
      %3336 = dma.done [#allocation4], 128
    $region57: #{tpu_custom_call.1} parent=1 // pred_fallthru
      _
    %3337 = vsyncpa [#allocation3], 1
    %3338 = vsyncpa [#allocation6], 1
    %3339 = vsyncpa [#allocation9], 1
    %3340 = vsyncpa [#allocation4], 1

</llo_original>
